<compile_context>
chip_gen: v7x
topology: tpu7x:2x2x1
jax: 0.10.0
libtpu: 0.0.40
codegen_flags: <defaults>
</compile_context>

<pallas_src>
import numpy as np
import jax
import jax.numpy as jnp
from jax.experimental import pallas as pl
from jax.experimental.pallas import tpu as pltpu


def _round_up(x, m):
    return ((x + m - 1) // m) * m


# ----------------------------- Pallas kernel ------------------------------

def _rpb_gather_kernel(idx_ref, tbl_ref, o_ref):
    """out[head, m] = table[idx[m], head]  via one-hot matmul on the MXU.

    idx_ref : (1, TM)   int32   flattened (row p, col q) gather indices
    tbl_ref : (NH, LP)  float32 transposed, zero-padded bias table
    o_ref   : (NH, TM)  float32 lane-dense output tile
    """
    idx = idx_ref[...]                                           # (1, TM)
    lp = tbl_ref.shape[1]
    tm = idx.shape[1]
    rows = jax.lax.broadcasted_iota(jnp.int32, (lp, tm), 0)      # (LP, TM)
    onehot = (rows == idx).astype(jnp.float32)                   # (LP, TM)
    o_ref[...] = jnp.dot(tbl_ref[...], onehot,
                         preferred_element_type=jnp.float32)     # (NH, TM)


# ------------------------- static index precompute -------------------------

def _build_relative_position_index(h, w):
    # Mirrors the PyTorch __init__ buffer exactly (torch.meshgrid default 'ij').
    coords = np.stack(np.meshgrid(np.arange(h), np.arange(w), indexing="ij"))
    coords_flatten = coords.reshape(2, -1)                        # (2, h*w)
    rel = coords_flatten[:, :, None] - coords_flatten[:, None, :]  # (2, hw, hw)
    rel = rel.transpose(1, 2, 0).astype(np.int64)                  # (hw, hw, 2)
    rel[:, :, 0] += h - 1
    rel[:, :, 1] += w - 1
    rel[:, :, 0] *= 2 * h - 1
    return rel.sum(-1).astype(np.int32)                            # (hw, hw)


# ------------------------------- forward -----------------------------------

def relative_position_bias_forward(table, relative_position_index, h, w, H, W,
                                    *, tile_m=2048):
    assert H % h == 0 and W % w == 0, "H, W must be multiples of h, w"
    L, num_heads = table.shape
    hw = h * w

    # Fuse gather-index + repeat_interleave expansion into one static int32 map.
    rpi = np.asarray(relative_position_index, dtype=np.int32).reshape(h, w, hw)
    full = np.repeat(rpi, H // h, axis=0)          # repeat_interleave over H
    full = np.repeat(full, W // w, axis=1)         # repeat_interleave over W
    flat_index = full.reshape(-1)                  # m = (i*W + j)*hw + q

    M = flat_index.size                            # H*W*h*w
    TM = min(tile_m, _round_up(M, 128))            # lane-dense output tiles
    MP = _round_up(M, TM)
    LP = _round_up(L, 128)                         # pad contraction dim

    idx = np.zeros((1, MP), np.int32)              # padded tail gathers row 0
    idx[0, :M] = flat_index
    idx = jnp.asarray(idx)

    tbl_t = jnp.zeros((num_heads, LP), jnp.float32)
    tbl_t = tbl_t.at[:, :L].set(table.astype(jnp.float32).T)

    out = pl.pallas_call(
        _rpb_gather_kernel,
        out_shape=jax.ShapeDtypeStruct((num_heads, MP), jnp.float32),
        grid_spec=pltpu.PrefetchScalarGridSpec(
            num_scalar_prefetch=0,
            grid=(MP // TM,),
            in_specs=[pl.BlockSpec((1, TM), lambda i: (0, i)),
                      pl.BlockSpec((num_heads, LP), lambda i: (0, 0))],
            out_specs=pl.BlockSpec((num_heads, TM), lambda i: (0, i)),
        ),
        compiler_params=pltpu.CompilerParams(
            dimension_semantics=("parallel",)),
    )(idx, tbl_t)

    out = out[:, :M].reshape(num_heads, H * W, hw)  # free contiguous reshape
    return out[None]                                # (1, num_heads, H*W, h*w)


class RelativePositionBias:
    """JAX/Pallas port of the PyTorch RelativePositionBias module."""

    def __init__(self, num_heads, h, w, key):
        self.num_heads, self.h, self.w = num_heads, h, w
        L = (2 * h - 1) * (2 * w - 1)
        self.relative_position_bias_table = (
            0.02 * jax.random.normal(key, (L, num_heads), jnp.float32))
        self.relative_position_index = _build_relative_position_index(h, w)

    def __call__(self, H, W):
        return relative_position_bias_forward(
            self.relative_position_bias_table, self.relative_position_index,
            self.h, self.w, H, W)


# ----------------------------- pure-JAX reference ---------------------------

def reference_forward(table, relative_position_index, h, w, H, W):
    hw = h * w
    nh = table.shape[1]
    rpi = jnp.asarray(np.asarray(relative_position_index)).reshape(-1)
    rpb = table[rpi].reshape(h, w, hw, nh)
    rpb = jnp.repeat(rpb, H // h, axis=0)
    rpb = jnp.repeat(rpb, W // w, axis=1)
    rpb = rpb.reshape(H * W, hw, nh)
    return jnp.transpose(rpb, (2, 0, 1))[None]


if __name__ == "__main__":
    # RelativePositionBias(num_heads=4, h=8, w=8); forward(H=16, W=16)
    num_heads, h, w = 4, 8, 8
    H, W = 16, 16

    key = jax.random.PRNGKey(0)
    mod = RelativePositionBias(num_heads, h, w, key)

    # Only the table is a traced array; the index/expansion is a static constant.
    fwd = jax.jit(lambda tbl: relative_position_bias_forward(
        tbl, mod.relative_position_index, mod.h, mod.w, H, W))

    out = fwd(mod.relative_position_bias_table)
    out = jax.block_until_ready(out)

    assert out.shape == (1, num_heads, H * W, h * w), out.shape
    assert bool(jnp.all(jnp.isfinite(out)))

    ref = reference_forward(mod.relative_position_bias_table,
                            mod.relative_position_index, h, w, H, W)
    assert bool(jnp.allclose(out, ref, atol=1e-3, rtol=1e-3)), (
        "max abs err = %f" % float(jnp.max(jnp.abs(out - ref))))

    print("KERNEL_OK")
</pallas_src>

<mosaic_0001>
module attributes {stable_mosaic.version = 11 : i64} {
  func.func @_rpb_gather_kernel(%arg0: i32, %arg1: memref<1x2048xi32, #tpu.memory_space<vmem>>, %arg2: memref<4x256xf32, #tpu.memory_space<vmem>>, %arg3: memref<4x2048xf32, #tpu.memory_space<vmem>>) attributes {dimension_semantics = [#tpu.dimension_semantics<parallel>], iteration_bounds = array<i64: 8>, scalar_prefetch = 0 : i64, scratch_operands = 0 : i64, tpu.core_type = #tpu.core_type<tc>, window_params = [{transform_indices = @transform_0, window_bounds = array<i64: 1, 2048>}, {pipeline_mode = #tpu.pipeline_mode<synchronous>, transform_indices = @transform_1, window_bounds = array<i64: 4, 256>}, {transform_indices = @transform_2, window_bounds = array<i64: 4, 2048>}]} {
    %c0 = arith.constant 0 : index
    %c0_0 = arith.constant 0 : index
    %0 = vector.load %arg1[%c0, %c0_0] : memref<1x2048xi32, #tpu.memory_space<vmem>>, vector<1x2048xi32>
    %1 = tpu.iota {dimensions = array<i32: 0>} : vector<256x2048xi32>
    %2 = vector.broadcast %0 : vector<1x2048xi32> to vector<256x2048xi32>
    %3 = arith.cmpi eq, %1, %2 : vector<256x2048xi32>
    %4 = arith.extui %3 : vector<256x2048xi1> to vector<256x2048xi32>
    %5 = arith.sitofp %4 : vector<256x2048xi32> to vector<256x2048xf32>
    %c0_1 = arith.constant 0 : index
    %c0_2 = arith.constant 0 : index
    %6 = vector.load %arg2[%c0_1, %c0_2] : memref<4x256xf32, #tpu.memory_space<vmem>>, vector<4x256xf32>
    %cst = arith.constant dense<0.000000e+00> : vector<4x2048xf32>
    %7 = tpu.matmul %6, %5, %cst {dimension_numbers = #tpu.dot_dimension_numbers<[1], [0], [0], [1], [0, 0, 1, 1], [], []>} : vector<4x256xf32>, vector<256x2048xf32>, vector<4x2048xf32> -> vector<4x2048xf32>
    %c0_3 = arith.constant 0 : index
    %c0_4 = arith.constant 0 : index
    %8 = vector.load %arg3[%c0_3, %c0_4] : memref<4x2048xf32, #tpu.memory_space<vmem>>, vector<4x2048xf32>
    tpu.vector_store %arg3[%c0_3, %c0_4], %7 {strides = array<i32>} : memref<4x2048xf32, #tpu.memory_space<vmem>>, vector<4x2048xf32>,
    return
  }
  func.func @transform_0(%arg0: i32) -> (i32, i32) {
    %c0_i32 = arith.constant 0 : i32
    %c0_i32_0 = arith.constant 0 : i32
    return %c0_i32, %arg0 : i32, i32
  }
  func.func @transform_1(%arg0: i32) -> (i32, i32) {
    %c0_i32 = arith.constant 0 : i32
    %c0_i32_0 = arith.constant 0 : i32
    %c0_i32_1 = arith.constant 0 : i32
    return %c0_i32, %c0_i32_0 : i32, i32
  }
  func.func @transform_2(%arg0: i32) -> (i32, i32) {
    %c0_i32 = arith.constant 0 : i32
    %c0_i32_0 = arith.constant 0 : i32
    return %c0_i32, %arg0 : i32, i32
  }
}

</mosaic_0001>

<llo_original>
// kernel: _lambda_.1
$region0: #{_lambda_.1}
  #allocation0 [shape = 'u32[]', space=smem, size = 0x4, offset = 0x4, fixed_abs, tag = 'smem constant byte address 0x4 - core index']
  #allocation1 [shape = 'u32[144,128]{1,0:T(1,128)}', space=vmem, size = 0x12000, scoped, tag = 'internal scratch']
  %s0 = inlined_call_operand.hbm [shape: s32[1,16384], index: 0, kind: input, shape index: {}]
  %s1 = inlined_call_operand.vmem [shape: f32[4,256], index: 1, kind: input, shape index: {}]
  %s2 = inlined_call_operand.vmem [shape: f32[4,16384], index: 2, kind: output, shape index: {}]
  %s3 = sld [smem:[#allocation0]]
  $region45: #{_lambda_.1} parent=0
    _
  %s5 = ssub.s32 1, %s3
  %s6 = scalar_select 0, %s5, %s3
  $region1: #{_lambda_.1} parent=0
    #allocation2 [shape = 'u8[16384]{0}', space=vmem, size = 0x4000, scoped, tag = 'input window, operand 0']
    #allocation3 [shape = 's32[2]{0}', space=sflag, size = 0x8, scoped, tag = 'scoped memory for _lambda_.1']
    %7 = vsyncpa [#allocation3], 0
    %s8 = scalar_lea.sflag [#allocation3], 1
    %9 = vsyncpa %s8, 0
    loop: start=0, step=1, limit=10
    $region2: #{_lambda_.1} parent=1 // loop_pre_header
      _
    $region3: #{_lambda_.1} parent=1 // loop_header
      %s11 = sphi 0, %s15
      %p12 = scmp.ge.s32.totalorder %s11, 10
      %s21 = sphi 0, %s23
      %s24 = sphi 0, %s21
      %s25 = sphi 0, %s24
      %s41 = sphi 0, %s25
      %s45 = sphi 0, %s45
      %s47 = sphi 0, %s45
      %s48 = sphi 0, %s47
      %s62 = sphi 0, %s48
      %s68 = sphi 0, %s70
      %s71 = sphi 0, %s68
      %s72 = sphi 0, %s71
      %s88 = sphi 0, %s72
    $region4: #{_lambda_.1} parent=1 // loop_header_branch
      %14 = sbr.rel (%p12) target = $region8
    $region5: #{_lambda_.1} parent=1 // loop_body
      %s16 = ssub.s32 %s11, 1
      %s17 = ssub.s32 %s11, 2
      %s18 = sadd.s32 %s11, 1
      %s19 = ssub.s32 %s11, %s18
      %p20 = scmp.eq.s32.totalorder %s19, 0
      %s22 = sadd.s32 %s21, 1
      %s23 = scalar_select %p20, %s21, %s22
      %p26 = pneg %p20
      %p27 = scmp.eq.s32.totalorder %s11, 7
      %p28 = por %p26, %p27
      %p29 = scmp.ne.s32.totalorder %s21, %s24
      %p30 = scmp.eq.s32.totalorder %s11, 0
      %p31 = por %p29, %p30
      %p32 = scmp.ne.s32.totalorder %s21, %s24
      %p33 = scmp.eq.s32.totalorder %s16, 7
      %p34 = por %p32, %p33
      %p35 = scmp.ne.s32.totalorder %s24, %s25
      %p36 = scmp.eq.s32.totalorder %s16, 0
      %p37 = por %p35, %p36
      %p38 = scmp.ne.s32.totalorder %s24, %s25
      %p39 = scmp.eq.s32.totalorder %s17, 7
      %p40 = por %p38, %p39
      %p42 = scmp.ne.s32.totalorder %s25, %s41
      %p43 = scmp.eq.s32.totalorder %s17, 0
      %p44 = por %p42, %p43
      %s46 = sadd.s32 %s45, 1
      %p49 = scmp.eq.s32.totalorder %s11, 7
      %p50 = scmp.ne.s32.totalorder %s45, %s47
      %p51 = scmp.eq.s32.totalorder %s11, 0
      %p52 = por %p50, %p51
      %p53 = scmp.ne.s32.totalorder %s45, %s47
      %p54 = scmp.eq.s32.totalorder %s16, 7
      %p55 = por %p53, %p54
      %p56 = scmp.ne.s32.totalorder %s47, %s48
      %p57 = scmp.eq.s32.totalorder %s16, 0
      %p58 = por %p56, %p57
      %p59 = scmp.ne.s32.totalorder %s47, %s48
      %p60 = scmp.eq.s32.totalorder %s17, 7
      %p61 = por %p59, %p60
      %p63 = scmp.ne.s32.totalorder %s48, %s62
      %p64 = scmp.eq.s32.totalorder %s17, 0
      %p65 = por %p63, %p64
      %s66 = ssub.s32 %s11, %s18
      %p67 = scmp.eq.s32.totalorder %s66, 0
      %s69 = sadd.s32 %s68, 1
      %s70 = scalar_select %p67, %s68, %s69
      %p73 = pneg %p67
      %p74 = scmp.eq.s32.totalorder %s11, 7
      %p75 = por %p73, %p74
      %p76 = scmp.ne.s32.totalorder %s68, %s71
      %p77 = scmp.eq.s32.totalorder %s11, 0
      %p78 = por %p76, %p77
      %p79 = scmp.ne.s32.totalorder %s68, %s71
      %p80 = scmp.eq.s32.totalorder %s16, 7
      %p81 = por %p79, %p80
      %p82 = scmp.ne.s32.totalorder %s71, %s72
      %p83 = scmp.eq.s32.totalorder %s16, 0
      %p84 = por %p82, %p83
      %p85 = scmp.ne.s32.totalorder %s71, %s72
      %p86 = scmp.eq.s32.totalorder %s17, 7
      %p87 = por %p85, %p86
      %p89 = scmp.ne.s32.totalorder %s72, %s88
      %p90 = scmp.eq.s32.totalorder %s17, 0
      %p91 = por %p89, %p90
      %p92 = scmp.le.s32.totalorder 1, %s11
      %p93 = scmp.lt.s32.totalorder %s11, 9
      %p94 = pnand %p92, %p93
      %p95 = pneg %p94
      // Predicated region
      $region9: #{_lambda_.1} parent=5 // pred_check
        _
      $region10: #{_lambda_.1} parent=5 // pred_check_branch
        %97 = sbr.rel (%p94) target = $region12
      $region11: #{_lambda_.1} parent=5 // pred_region
        %s98 = ssub.s32 %s11, 1
        // Predicated region
        $region13: #{_lambda_.1} parent=11 // pred_check
          %p99 = pneg %p58
        $region14: #{_lambda_.1} parent=11 // pred_check_branch
          %101 = sbr.rel (%p99) target = $region16
        $region15: #{_lambda_.1} parent=11 // pred_region
          _
        $region16: #{_lambda_.1} parent=11 // pred_fallthru
          _
      $region12: #{_lambda_.1} parent=5 // pred_fallthru
        _
      %p102 = scmp.lt.s32.totalorder %s11, 8
      // Predicated region
      $region17: #{_lambda_.1} parent=5 // pred_check
        %p103 = pneg %p102
      $region18: #{_lambda_.1} parent=5 // pred_check_branch
        %105 = sbr.rel (%p103) target = $region20
      $region19: #{_lambda_.1} parent=5 // pred_region
        // Predicated region
        $region21: #{_lambda_.1} parent=19 // pred_check
          %p106 = pneg %p31
        $region22: #{_lambda_.1} parent=19 // pred_check_branch
          %108 = sbr.rel (%p106) target = $region24
        $region23: #{_lambda_.1} parent=19 // pred_region
          %s109 = sand.u32 %s21, 1
          %s110 = scalar_lea.sflag [#allocation3], %s109
          %s111 = sand.u32 %s21, 1
          %s112 = smul.addr %s111, 16
          %s113 = scalar_lea.vmem [#allocation2], %s112
          %s114 = smul.u32 16, %s11
          %s116 = ssub.s32 256, 256
          %117 = vsyncadd %s110, %s116
          %s118 = smul.addr %s114, 16
          %s119 = scalar_lea.hbm %s0, %s118
          %s121 = sshll.u32 %s113, 4
          %s122 = int_to_ptr.vmem [resolvable:$true] %s121
          %124 = dma.hbm_to_vmem [thread:$0]  %s119, 256, %s122, %s110
        $region24: #{_lambda_.1} parent=19 // pred_fallthru
          _
      $region20: #{_lambda_.1} parent=5 // pred_fallthru
        _
      %p125 = scmp.le.s32.totalorder 1, %s11
      %p126 = scmp.lt.s32.totalorder %s11, 9
      %p127 = pnand %p125, %p126
      %p128 = pneg %p127
      // Predicated region
      $region25: #{_lambda_.1} parent=5 // pred_check
        _
      $region26: #{_lambda_.1} parent=5 // pred_check_branch
        %130 = sbr.rel (%p127) target = $region28
      $region27: #{_lambda_.1} parent=5 // pred_region
        %s131 = ssub.s32 %s11, 1
        %s132 = sand.u32 %s24, 1
        %s133 = scalar_lea.sflag [#allocation3], %s132
        %s134 = sand.u32 %s24, 1
        %s135 = smul.addr %s134, 16
        %s136 = scalar_lea.vmem [#allocation2], %s135
        // Predicated region
        $region29: #{_lambda_.1} parent=27 // pred_check
          %p137 = pneg %p37
        $region30: #{_lambda_.1} parent=27 // pred_check_branch
          %139 = sbr.rel (%p137) target = $region32
        $region31: #{_lambda_.1} parent=27 // pred_region
          %140 = dma.done %s133, 256
        $region32: #{_lambda_.1} parent=27 // pred_fallthru
          _
        %s141 = sand.u32 %s24, 1
        %s142 = scalar_lea.sflag [#allocation3], %s141
        %s143 = sand.u32 %s24, 1
        %s144 = smul.addr %s143, 16
        %s145 = scalar_lea.vmem [#allocation2], %s144
        %p146 = pneg %p37
        %p147 = pneg %p34
        %p148 = pneg %p58
        %p149 = pneg %p55
        %p150 = pneg %p84
        %p151 = pneg %p81
        %s152 = smul.u32 16, %s16
        %p153 = scmp.lt.s32.totalorder %s152, 127
        %s154 = scalar_select %p153, %s152, 127
        %s155 = smul.addr %s154, 4
        %s156 = scalar_lea.vmem %s2, %s155
        %s157 = smul.u32 16, %s16
        %s158 = smul.u32 16, %s16
        %p159 = scmp.lt.s32.totalorder %s158, 127
        %s160 = scalar_select %p159, %s158, 127
        %s161 = smul.addr %s160, 4
        %s162 = scalar_lea.vmem %s2, %s161
        %s163 = smul.u32 16, %s16
        %v164 = vld [vmem:[%s136] sm:$0xff]
        %v165 = vld [vmem:[%s136 + $0x8] sm:$0xff]
        %v166 = vlaneseq
        %v167 = vshrl.u32 %v166, 7
        %v168 = vadd.s32 %v167, 8
        %v169 = vadd.s32 %v167, 16
        %v170 = vadd.s32 %v167, 24
        %v171 = vadd.s32 %v167, 32
        %v172 = vadd.s32 %v167, 40
        %v173 = vadd.s32 %v167, 48
        %v174 = vadd.s32 %v167, 56
        %v175 = vadd.s32 %v167, 64
        %v176 = vadd.s32 %v167, 72
        %v177 = vadd.s32 %v167, 80
        %v178 = vadd.s32 %v167, 88
        %v179 = vadd.s32 %v167, 96
        %v180 = vadd.s32 %v167, 104
        %v181 = vadd.s32 %v167, 112
        %v182 = vadd.s32 %v167, 120
        %v183 = vadd.s32 %v167, 128
        %v184 = vadd.s32 %v167, 136
        %v185 = vadd.s32 %v167, 144
        %v186 = vadd.s32 %v167, 152
        %v187 = vadd.s32 %v167, 160
        %v188 = vadd.s32 %v167, 168
        %v189 = vadd.s32 %v167, 176
        %v190 = vadd.s32 %v167, 184
        %v191 = vadd.s32 %v167, 192
        %v192 = vadd.s32 %v167, 200
        %v193 = vadd.s32 %v167, 208
        %v194 = vadd.s32 %v167, 216
        %v195 = vadd.s32 %v167, 224
        %v196 = vadd.s32 %v167, 232
        %v197 = vadd.s32 %v167, 240
        %v198 = vadd.s32 %v167, 248
        %v199 = vlaneseq
        %v200 = vshrl.u32 %v199, 7
        %v201 = vsub.s32 0, %v200
        %v202 = vrot.slane %v164, %v201
        %v203 = vlaneseq
        %v204 = vshrl.u32 %v203, 7
        %v205 = vsub.s32 1, %v204
        %v206 = vrot.slane %v164, %v205
        %v207 = vlaneseq
        %v208 = vshrl.u32 %v207, 7
        %v209 = vsub.s32 2, %v208
        %v210 = vrot.slane %v164, %v209
        %v211 = vlaneseq
        %v212 = vshrl.u32 %v211, 7
        %v213 = vsub.s32 3, %v212
        %v214 = vrot.slane %v164, %v213
        %v215 = vlaneseq
        %v216 = vshrl.u32 %v215, 7
        %v217 = vsub.s32 4, %v216
        %v218 = vrot.slane %v164, %v217
        %v219 = vlaneseq
        %v220 = vshrl.u32 %v219, 7
        %v221 = vsub.s32 5, %v220
        %v222 = vrot.slane %v164, %v221
        %v223 = vlaneseq
        %v224 = vshrl.u32 %v223, 7
        %v225 = vsub.s32 6, %v224
        %v226 = vrot.slane %v164, %v225
        %v227 = vlaneseq
        %v228 = vshrl.u32 %v227, 7
        %v229 = vsub.s32 7, %v228
        %v230 = vrot.slane %v164, %v229
        %v231 = vlaneseq
        %v232 = vshrl.u32 %v231, 7
        %v233 = vsub.s32 0, %v232
        %v234 = vrot.slane %v165, %v233
        %v235 = vlaneseq
        %v236 = vshrl.u32 %v235, 7
        %v237 = vsub.s32 1, %v236
        %v238 = vrot.slane %v165, %v237
        %v239 = vlaneseq
        %v240 = vshrl.u32 %v239, 7
        %v241 = vsub.s32 2, %v240
        %v242 = vrot.slane %v165, %v241
        %v243 = vlaneseq
        %v244 = vshrl.u32 %v243, 7
        %v245 = vsub.s32 3, %v244
        %v246 = vrot.slane %v165, %v245
        %v247 = vlaneseq
        %v248 = vshrl.u32 %v247, 7
        %v249 = vsub.s32 4, %v248
        %v250 = vrot.slane %v165, %v249
        %v251 = vlaneseq
        %v252 = vshrl.u32 %v251, 7
        %v253 = vsub.s32 5, %v252
        %v254 = vrot.slane %v165, %v253
        %v255 = vlaneseq
        %v256 = vshrl.u32 %v255, 7
        %v257 = vsub.s32 6, %v256
        %v258 = vrot.slane %v165, %v257
        %v259 = vlaneseq
        %v260 = vshrl.u32 %v259, 7
        %v261 = vsub.s32 7, %v260
        %v262 = vrot.slane %v165, %v261
        %vm263 = vcmp.eq.s32.totalorder %v167, %v202
        %vm264 = vcmp.eq.s32.totalorder %v167, %v206
        %vm265 = vcmp.eq.s32.totalorder %v167, %v210
        %vm266 = vcmp.eq.s32.totalorder %v167, %v214
        %vm267 = vcmp.eq.s32.totalorder %v167, %v218
        %vm268 = vcmp.eq.s32.totalorder %v167, %v222
        %vm269 = vcmp.eq.s32.totalorder %v167, %v226
        %vm270 = vcmp.eq.s32.totalorder %v167, %v230
        %vm271 = vcmp.eq.s32.totalorder %v167, %v234
        %vm272 = vcmp.eq.s32.totalorder %v167, %v238
        %vm273 = vcmp.eq.s32.totalorder %v167, %v242
        %vm274 = vcmp.eq.s32.totalorder %v167, %v246
        %vm275 = vcmp.eq.s32.totalorder %v167, %v250
        %vm276 = vcmp.eq.s32.totalorder %v167, %v254
        %vm277 = vcmp.eq.s32.totalorder %v167, %v258
        %vm278 = vcmp.eq.s32.totalorder %v167, %v262
        %vm279 = vcmp.eq.s32.totalorder %v168, %v202
        %vm280 = vcmp.eq.s32.totalorder %v168, %v206
        %vm281 = vcmp.eq.s32.totalorder %v168, %v210
        %vm282 = vcmp.eq.s32.totalorder %v168, %v214
        %vm283 = vcmp.eq.s32.totalorder %v168, %v218
        %vm284 = vcmp.eq.s32.totalorder %v168, %v222
        %vm285 = vcmp.eq.s32.totalorder %v168, %v226
        %vm286 = vcmp.eq.s32.totalorder %v168, %v230
        %vm287 = vcmp.eq.s32.totalorder %v168, %v234
        %vm288 = vcmp.eq.s32.totalorder %v168, %v238
        %vm289 = vcmp.eq.s32.totalorder %v168, %v242
        %vm290 = vcmp.eq.s32.totalorder %v168, %v246
        %vm291 = vcmp.eq.s32.totalorder %v168, %v250
        %vm292 = vcmp.eq.s32.totalorder %v168, %v254
        %vm293 = vcmp.eq.s32.totalorder %v168, %v258
        %vm294 = vcmp.eq.s32.totalorder %v168, %v262
        %vm295 = vcmp.eq.s32.totalorder %v169, %v202
        %vm296 = vcmp.eq.s32.totalorder %v169, %v206
        %vm297 = vcmp.eq.s32.totalorder %v169, %v210
        %vm298 = vcmp.eq.s32.totalorder %v169, %v214
        %vm299 = vcmp.eq.s32.totalorder %v169, %v218
        %vm300 = vcmp.eq.s32.totalorder %v169, %v222
        %vm301 = vcmp.eq.s32.totalorder %v169, %v226
        %vm302 = vcmp.eq.s32.totalorder %v169, %v230
        %vm303 = vcmp.eq.s32.totalorder %v169, %v234
        %vm304 = vcmp.eq.s32.totalorder %v169, %v238
        %vm305 = vcmp.eq.s32.totalorder %v169, %v242
        %vm306 = vcmp.eq.s32.totalorder %v169, %v246
        %vm307 = vcmp.eq.s32.totalorder %v169, %v250
        %vm308 = vcmp.eq.s32.totalorder %v169, %v254
        %vm309 = vcmp.eq.s32.totalorder %v169, %v258
        %vm310 = vcmp.eq.s32.totalorder %v169, %v262
        %vm311 = vcmp.eq.s32.totalorder %v170, %v202
        %vm312 = vcmp.eq.s32.totalorder %v170, %v206
        %vm313 = vcmp.eq.s32.totalorder %v170, %v210
        %vm314 = vcmp.eq.s32.totalorder %v170, %v214
        %vm315 = vcmp.eq.s32.totalorder %v170, %v218
        %vm316 = vcmp.eq.s32.totalorder %v170, %v222
        %vm317 = vcmp.eq.s32.totalorder %v170, %v226
        %vm318 = vcmp.eq.s32.totalorder %v170, %v230
        %vm319 = vcmp.eq.s32.totalorder %v170, %v234
        %vm320 = vcmp.eq.s32.totalorder %v170, %v238
        %vm321 = vcmp.eq.s32.totalorder %v170, %v242
        %vm322 = vcmp.eq.s32.totalorder %v170, %v246
        %vm323 = vcmp.eq.s32.totalorder %v170, %v250
        %vm324 = vcmp.eq.s32.totalorder %v170, %v254
        %vm325 = vcmp.eq.s32.totalorder %v170, %v258
        %vm326 = vcmp.eq.s32.totalorder %v170, %v262
        %vm327 = vcmp.eq.s32.totalorder %v171, %v202
        %vm328 = vcmp.eq.s32.totalorder %v171, %v206
        %vm329 = vcmp.eq.s32.totalorder %v171, %v210
        %vm330 = vcmp.eq.s32.totalorder %v171, %v214
        %vm331 = vcmp.eq.s32.totalorder %v171, %v218
        %vm332 = vcmp.eq.s32.totalorder %v171, %v222
        %vm333 = vcmp.eq.s32.totalorder %v171, %v226
        %vm334 = vcmp.eq.s32.totalorder %v171, %v230
        %vm335 = vcmp.eq.s32.totalorder %v171, %v234
        %vm336 = vcmp.eq.s32.totalorder %v171, %v238
        %vm337 = vcmp.eq.s32.totalorder %v171, %v242
        %vm338 = vcmp.eq.s32.totalorder %v171, %v246
        %vm339 = vcmp.eq.s32.totalorder %v171, %v250
        %vm340 = vcmp.eq.s32.totalorder %v171, %v254
        %vm341 = vcmp.eq.s32.totalorder %v171, %v258
        %vm342 = vcmp.eq.s32.totalorder %v171, %v262
        %vm343 = vcmp.eq.s32.totalorder %v172, %v202
        %vm344 = vcmp.eq.s32.totalorder %v172, %v206
        %vm345 = vcmp.eq.s32.totalorder %v172, %v210
        %vm346 = vcmp.eq.s32.totalorder %v172, %v214
        %vm347 = vcmp.eq.s32.totalorder %v172, %v218
        %vm348 = vcmp.eq.s32.totalorder %v172, %v222
        %vm349 = vcmp.eq.s32.totalorder %v172, %v226
        %vm350 = vcmp.eq.s32.totalorder %v172, %v230
        %vm351 = vcmp.eq.s32.totalorder %v172, %v234
        %vm352 = vcmp.eq.s32.totalorder %v172, %v238
        %vm353 = vcmp.eq.s32.totalorder %v172, %v242
        %vm354 = vcmp.eq.s32.totalorder %v172, %v246
        %vm355 = vcmp.eq.s32.totalorder %v172, %v250
        %vm356 = vcmp.eq.s32.totalorder %v172, %v254
        %vm357 = vcmp.eq.s32.totalorder %v172, %v258
        %vm358 = vcmp.eq.s32.totalorder %v172, %v262
        %vm359 = vcmp.eq.s32.totalorder %v173, %v202
        %vm360 = vcmp.eq.s32.totalorder %v173, %v206
        %vm361 = vcmp.eq.s32.totalorder %v173, %v210
        %vm362 = vcmp.eq.s32.totalorder %v173, %v214
        %vm363 = vcmp.eq.s32.totalorder %v173, %v218
        %vm364 = vcmp.eq.s32.totalorder %v173, %v222
        %vm365 = vcmp.eq.s32.totalorder %v173, %v226
        %vm366 = vcmp.eq.s32.totalorder %v173, %v230
        %vm367 = vcmp.eq.s32.totalorder %v173, %v234
        %vm368 = vcmp.eq.s32.totalorder %v173, %v238
        %vm369 = vcmp.eq.s32.totalorder %v173, %v242
        %vm370 = vcmp.eq.s32.totalorder %v173, %v246
        %vm371 = vcmp.eq.s32.totalorder %v173, %v250
        %vm372 = vcmp.eq.s32.totalorder %v173, %v254
        %vm373 = vcmp.eq.s32.totalorder %v173, %v258
        %vm374 = vcmp.eq.s32.totalorder %v173, %v262
        %vm375 = vcmp.eq.s32.totalorder %v174, %v202
        %vm376 = vcmp.eq.s32.totalorder %v174, %v206
        %vm377 = vcmp.eq.s32.totalorder %v174, %v210
        %vm378 = vcmp.eq.s32.totalorder %v174, %v214
        %vm379 = vcmp.eq.s32.totalorder %v174, %v218
        %vm380 = vcmp.eq.s32.totalorder %v174, %v222
        %vm381 = vcmp.eq.s32.totalorder %v174, %v226
        %vm382 = vcmp.eq.s32.totalorder %v174, %v230
        %vm383 = vcmp.eq.s32.totalorder %v174, %v234
        %vm384 = vcmp.eq.s32.totalorder %v174, %v238
        %vm385 = vcmp.eq.s32.totalorder %v174, %v242
        %vm386 = vcmp.eq.s32.totalorder %v174, %v246
        %vm387 = vcmp.eq.s32.totalorder %v174, %v250
        %vm388 = vcmp.eq.s32.totalorder %v174, %v254
        %vm389 = vcmp.eq.s32.totalorder %v174, %v258
        %vm390 = vcmp.eq.s32.totalorder %v174, %v262
        %vm391 = vcmp.eq.s32.totalorder %v175, %v202
        %vm392 = vcmp.eq.s32.totalorder %v175, %v206
        %vm393 = vcmp.eq.s32.totalorder %v175, %v210
        %vm394 = vcmp.eq.s32.totalorder %v175, %v214
        %vm395 = vcmp.eq.s32.totalorder %v175, %v218
        %vm396 = vcmp.eq.s32.totalorder %v175, %v222
        %vm397 = vcmp.eq.s32.totalorder %v175, %v226
        %vm398 = vcmp.eq.s32.totalorder %v175, %v230
        %vm399 = vcmp.eq.s32.totalorder %v175, %v234
        %vm400 = vcmp.eq.s32.totalorder %v175, %v238
        %vm401 = vcmp.eq.s32.totalorder %v175, %v242
        %vm402 = vcmp.eq.s32.totalorder %v175, %v246
        %vm403 = vcmp.eq.s32.totalorder %v175, %v250
        %vm404 = vcmp.eq.s32.totalorder %v175, %v254
        %vm405 = vcmp.eq.s32.totalorder %v175, %v258
        %vm406 = vcmp.eq.s32.totalorder %v175, %v262
        %vm407 = vcmp.eq.s32.totalorder %v176, %v202
        %vm408 = vcmp.eq.s32.totalorder %v176, %v206
        %vm409 = vcmp.eq.s32.totalorder %v176, %v210
        %vm410 = vcmp.eq.s32.totalorder %v176, %v214
        %vm411 = vcmp.eq.s32.totalorder %v176, %v218
        %vm412 = vcmp.eq.s32.totalorder %v176, %v222
        %vm413 = vcmp.eq.s32.totalorder %v176, %v226
        %vm414 = vcmp.eq.s32.totalorder %v176, %v230
        %vm415 = vcmp.eq.s32.totalorder %v176, %v234
        %vm416 = vcmp.eq.s32.totalorder %v176, %v238
        %vm417 = vcmp.eq.s32.totalorder %v176, %v242
        %vm418 = vcmp.eq.s32.totalorder %v176, %v246
        %vm419 = vcmp.eq.s32.totalorder %v176, %v250
        %vm420 = vcmp.eq.s32.totalorder %v176, %v254
        %vm421 = vcmp.eq.s32.totalorder %v176, %v258
        %vm422 = vcmp.eq.s32.totalorder %v176, %v262
        %vm423 = vcmp.eq.s32.totalorder %v177, %v202
        %vm424 = vcmp.eq.s32.totalorder %v177, %v206
        %vm425 = vcmp.eq.s32.totalorder %v177, %v210
        %vm426 = vcmp.eq.s32.totalorder %v177, %v214
        %vm427 = vcmp.eq.s32.totalorder %v177, %v218
        %vm428 = vcmp.eq.s32.totalorder %v177, %v222
        %vm429 = vcmp.eq.s32.totalorder %v177, %v226
        %vm430 = vcmp.eq.s32.totalorder %v177, %v230
        %vm431 = vcmp.eq.s32.totalorder %v177, %v234
        %vm432 = vcmp.eq.s32.totalorder %v177, %v238
        %vm433 = vcmp.eq.s32.totalorder %v177, %v242
        %vm434 = vcmp.eq.s32.totalorder %v177, %v246
        %vm435 = vcmp.eq.s32.totalorder %v177, %v250
        %vm436 = vcmp.eq.s32.totalorder %v177, %v254
        %vm437 = vcmp.eq.s32.totalorder %v177, %v258
        %vm438 = vcmp.eq.s32.totalorder %v177, %v262
        %vm439 = vcmp.eq.s32.totalorder %v178, %v202
        %vm440 = vcmp.eq.s32.totalorder %v178, %v206
        %vm441 = vcmp.eq.s32.totalorder %v178, %v210
        %vm442 = vcmp.eq.s32.totalorder %v178, %v214
        %vm443 = vcmp.eq.s32.totalorder %v178, %v218
        %vm444 = vcmp.eq.s32.totalorder %v178, %v222
        %vm445 = vcmp.eq.s32.totalorder %v178, %v226
        %vm446 = vcmp.eq.s32.totalorder %v178, %v230
        %vm447 = vcmp.eq.s32.totalorder %v178, %v234
        %vm448 = vcmp.eq.s32.totalorder %v178, %v238
        %vm449 = vcmp.eq.s32.totalorder %v178, %v242
        %vm450 = vcmp.eq.s32.totalorder %v178, %v246
        %vm451 = vcmp.eq.s32.totalorder %v178, %v250
        %vm452 = vcmp.eq.s32.totalorder %v178, %v254
        %vm453 = vcmp.eq.s32.totalorder %v178, %v258
        %vm454 = vcmp.eq.s32.totalorder %v178, %v262
        %vm455 = vcmp.eq.s32.totalorder %v179, %v202
        %vm456 = vcmp.eq.s32.totalorder %v179, %v206
        %vm457 = vcmp.eq.s32.totalorder %v179, %v210
        %vm458 = vcmp.eq.s32.totalorder %v179, %v214
        %vm459 = vcmp.eq.s32.totalorder %v179, %v218
        %vm460 = vcmp.eq.s32.totalorder %v179, %v222
        %vm461 = vcmp.eq.s32.totalorder %v179, %v226
        %vm462 = vcmp.eq.s32.totalorder %v179, %v230
        %vm463 = vcmp.eq.s32.totalorder %v179, %v234
        %vm464 = vcmp.eq.s32.totalorder %v179, %v238
        %vm465 = vcmp.eq.s32.totalorder %v179, %v242
        %vm466 = vcmp.eq.s32.totalorder %v179, %v246
        %vm467 = vcmp.eq.s32.totalorder %v179, %v250
        %vm468 = vcmp.eq.s32.totalorder %v179, %v254
        %vm469 = vcmp.eq.s32.totalorder %v179, %v258
        %vm470 = vcmp.eq.s32.totalorder %v179, %v262
        %vm471 = vcmp.eq.s32.totalorder %v180, %v202
        %vm472 = vcmp.eq.s32.totalorder %v180, %v206
        %vm473 = vcmp.eq.s32.totalorder %v180, %v210
        %vm474 = vcmp.eq.s32.totalorder %v180, %v214
        %vm475 = vcmp.eq.s32.totalorder %v180, %v218
        %vm476 = vcmp.eq.s32.totalorder %v180, %v222
        %vm477 = vcmp.eq.s32.totalorder %v180, %v226
        %vm478 = vcmp.eq.s32.totalorder %v180, %v230
        %vm479 = vcmp.eq.s32.totalorder %v180, %v234
        %vm480 = vcmp.eq.s32.totalorder %v180, %v238
        %vm481 = vcmp.eq.s32.totalorder %v180, %v242
        %vm482 = vcmp.eq.s32.totalorder %v180, %v246
        %vm483 = vcmp.eq.s32.totalorder %v180, %v250
        %vm484 = vcmp.eq.s32.totalorder %v180, %v254
        %vm485 = vcmp.eq.s32.totalorder %v180, %v258
        %vm486 = vcmp.eq.s32.totalorder %v180, %v262
        %vm487 = vcmp.eq.s32.totalorder %v181, %v202
        %vm488 = vcmp.eq.s32.totalorder %v181, %v206
        %vm489 = vcmp.eq.s32.totalorder %v181, %v210
        %vm490 = vcmp.eq.s32.totalorder %v181, %v214
        %vm491 = vcmp.eq.s32.totalorder %v181, %v218
        %vm492 = vcmp.eq.s32.totalorder %v181, %v222
        %vm493 = vcmp.eq.s32.totalorder %v181, %v226
        %vm494 = vcmp.eq.s32.totalorder %v181, %v230
        %vm495 = vcmp.eq.s32.totalorder %v181, %v234
        %vm496 = vcmp.eq.s32.totalorder %v181, %v238
        %vm497 = vcmp.eq.s32.totalorder %v181, %v242
        %vm498 = vcmp.eq.s32.totalorder %v181, %v246
        %vm499 = vcmp.eq.s32.totalorder %v181, %v250
        %vm500 = vcmp.eq.s32.totalorder %v181, %v254
        %vm501 = vcmp.eq.s32.totalorder %v181, %v258
        %vm502 = vcmp.eq.s32.totalorder %v181, %v262
        %vm503 = vcmp.eq.s32.totalorder %v182, %v202
        %vm504 = vcmp.eq.s32.totalorder %v182, %v206
        %vm505 = vcmp.eq.s32.totalorder %v182, %v210
        %vm506 = vcmp.eq.s32.totalorder %v182, %v214
        %vm507 = vcmp.eq.s32.totalorder %v182, %v218
        %vm508 = vcmp.eq.s32.totalorder %v182, %v222
        %vm509 = vcmp.eq.s32.totalorder %v182, %v226
        %vm510 = vcmp.eq.s32.totalorder %v182, %v230
        %vm511 = vcmp.eq.s32.totalorder %v182, %v234
        %vm512 = vcmp.eq.s32.totalorder %v182, %v238
        %vm513 = vcmp.eq.s32.totalorder %v182, %v242
        %vm514 = vcmp.eq.s32.totalorder %v182, %v246
        %vm515 = vcmp.eq.s32.totalorder %v182, %v250
        %vm516 = vcmp.eq.s32.totalorder %v182, %v254
        %vm517 = vcmp.eq.s32.totalorder %v182, %v258
        %vm518 = vcmp.eq.s32.totalorder %v182, %v262
        %vm519 = vcmp.eq.s32.totalorder %v183, %v202
        %vm520 = vcmp.eq.s32.totalorder %v183, %v206
        %vm521 = vcmp.eq.s32.totalorder %v183, %v210
        %vm522 = vcmp.eq.s32.totalorder %v183, %v214
        %vm523 = vcmp.eq.s32.totalorder %v183, %v218
        %vm524 = vcmp.eq.s32.totalorder %v183, %v222
        %vm525 = vcmp.eq.s32.totalorder %v183, %v226
        %vm526 = vcmp.eq.s32.totalorder %v183, %v230
        %vm527 = vcmp.eq.s32.totalorder %v183, %v234
        %vm528 = vcmp.eq.s32.totalorder %v183, %v238
        %vm529 = vcmp.eq.s32.totalorder %v183, %v242
        %vm530 = vcmp.eq.s32.totalorder %v183, %v246
        %vm531 = vcmp.eq.s32.totalorder %v183, %v250
        %vm532 = vcmp.eq.s32.totalorder %v183, %v254
        %vm533 = vcmp.eq.s32.totalorder %v183, %v258
        %vm534 = vcmp.eq.s32.totalorder %v183, %v262
        %vm535 = vcmp.eq.s32.totalorder %v184, %v202
        %vm536 = vcmp.eq.s32.totalorder %v184, %v206
        %vm537 = vcmp.eq.s32.totalorder %v184, %v210
        %vm538 = vcmp.eq.s32.totalorder %v184, %v214
        %vm539 = vcmp.eq.s32.totalorder %v184, %v218
        %vm540 = vcmp.eq.s32.totalorder %v184, %v222
        %vm541 = vcmp.eq.s32.totalorder %v184, %v226
        %vm542 = vcmp.eq.s32.totalorder %v184, %v230
        %vm543 = vcmp.eq.s32.totalorder %v184, %v234
        %vm544 = vcmp.eq.s32.totalorder %v184, %v238
        %vm545 = vcmp.eq.s32.totalorder %v184, %v242
        %vm546 = vcmp.eq.s32.totalorder %v184, %v246
        %vm547 = vcmp.eq.s32.totalorder %v184, %v250
        %vm548 = vcmp.eq.s32.totalorder %v184, %v254
        %vm549 = vcmp.eq.s32.totalorder %v184, %v258
        %vm550 = vcmp.eq.s32.totalorder %v184, %v262
        %vm551 = vcmp.eq.s32.totalorder %v185, %v202
        %vm552 = vcmp.eq.s32.totalorder %v185, %v206
        %vm553 = vcmp.eq.s32.totalorder %v185, %v210
        %vm554 = vcmp.eq.s32.totalorder %v185, %v214
        %vm555 = vcmp.eq.s32.totalorder %v185, %v218
        %vm556 = vcmp.eq.s32.totalorder %v185, %v222
        %vm557 = vcmp.eq.s32.totalorder %v185, %v226
        %vm558 = vcmp.eq.s32.totalorder %v185, %v230
        %vm559 = vcmp.eq.s32.totalorder %v185, %v234
        %vm560 = vcmp.eq.s32.totalorder %v185, %v238
        %vm561 = vcmp.eq.s32.totalorder %v185, %v242
        %vm562 = vcmp.eq.s32.totalorder %v185, %v246
        %vm563 = vcmp.eq.s32.totalorder %v185, %v250
        %vm564 = vcmp.eq.s32.totalorder %v185, %v254
        %vm565 = vcmp.eq.s32.totalorder %v185, %v258
        %vm566 = vcmp.eq.s32.totalorder %v185, %v262
        %vm567 = vcmp.eq.s32.totalorder %v186, %v202
        %vm568 = vcmp.eq.s32.totalorder %v186, %v206
        %vm569 = vcmp.eq.s32.totalorder %v186, %v210
        %vm570 = vcmp.eq.s32.totalorder %v186, %v214
        %vm571 = vcmp.eq.s32.totalorder %v186, %v218
        %vm572 = vcmp.eq.s32.totalorder %v186, %v222
        %vm573 = vcmp.eq.s32.totalorder %v186, %v226
        %vm574 = vcmp.eq.s32.totalorder %v186, %v230
        %vm575 = vcmp.eq.s32.totalorder %v186, %v234
        %vm576 = vcmp.eq.s32.totalorder %v186, %v238
        %vm577 = vcmp.eq.s32.totalorder %v186, %v242
        %vm578 = vcmp.eq.s32.totalorder %v186, %v246
        %vm579 = vcmp.eq.s32.totalorder %v186, %v250
        %vm580 = vcmp.eq.s32.totalorder %v186, %v254
        %vm581 = vcmp.eq.s32.totalorder %v186, %v258
        %vm582 = vcmp.eq.s32.totalorder %v186, %v262
        %vm583 = vcmp.eq.s32.totalorder %v187, %v202
        %vm584 = vcmp.eq.s32.totalorder %v187, %v206
        %vm585 = vcmp.eq.s32.totalorder %v187, %v210
        %vm586 = vcmp.eq.s32.totalorder %v187, %v214
        %vm587 = vcmp.eq.s32.totalorder %v187, %v218
        %vm588 = vcmp.eq.s32.totalorder %v187, %v222
        %vm589 = vcmp.eq.s32.totalorder %v187, %v226
        %vm590 = vcmp.eq.s32.totalorder %v187, %v230
        %vm591 = vcmp.eq.s32.totalorder %v187, %v234
        %vm592 = vcmp.eq.s32.totalorder %v187, %v238
        %vm593 = vcmp.eq.s32.totalorder %v187, %v242
        %vm594 = vcmp.eq.s32.totalorder %v187, %v246
        %vm595 = vcmp.eq.s32.totalorder %v187, %v250
        %vm596 = vcmp.eq.s32.totalorder %v187, %v254
        %vm597 = vcmp.eq.s32.totalorder %v187, %v258
        %vm598 = vcmp.eq.s32.totalorder %v187, %v262
        %vm599 = vcmp.eq.s32.totalorder %v188, %v202
        %vm600 = vcmp.eq.s32.totalorder %v188, %v206
        %vm601 = vcmp.eq.s32.totalorder %v188, %v210
        %vm602 = vcmp.eq.s32.totalorder %v188, %v214
        %vm603 = vcmp.eq.s32.totalorder %v188, %v218
        %vm604 = vcmp.eq.s32.totalorder %v188, %v222
        %vm605 = vcmp.eq.s32.totalorder %v188, %v226
        %vm606 = vcmp.eq.s32.totalorder %v188, %v230
        %vm607 = vcmp.eq.s32.totalorder %v188, %v234
        %vm608 = vcmp.eq.s32.totalorder %v188, %v238
        %vm609 = vcmp.eq.s32.totalorder %v188, %v242
        %vm610 = vcmp.eq.s32.totalorder %v188, %v246
        %vm611 = vcmp.eq.s32.totalorder %v188, %v250
        %vm612 = vcmp.eq.s32.totalorder %v188, %v254
        %vm613 = vcmp.eq.s32.totalorder %v188, %v258
        %vm614 = vcmp.eq.s32.totalorder %v188, %v262
        %vm615 = vcmp.eq.s32.totalorder %v189, %v202
        %vm616 = vcmp.eq.s32.totalorder %v189, %v206
        %vm617 = vcmp.eq.s32.totalorder %v189, %v210
        %vm618 = vcmp.eq.s32.totalorder %v189, %v214
        %vm619 = vcmp.eq.s32.totalorder %v189, %v218
        %vm620 = vcmp.eq.s32.totalorder %v189, %v222
        %vm621 = vcmp.eq.s32.totalorder %v189, %v226
        %vm622 = vcmp.eq.s32.totalorder %v189, %v230
        %vm623 = vcmp.eq.s32.totalorder %v189, %v234
        %vm624 = vcmp.eq.s32.totalorder %v189, %v238
        %vm625 = vcmp.eq.s32.totalorder %v189, %v242
        %vm626 = vcmp.eq.s32.totalorder %v189, %v246
        %vm627 = vcmp.eq.s32.totalorder %v189, %v250
        %vm628 = vcmp.eq.s32.totalorder %v189, %v254
        %vm629 = vcmp.eq.s32.totalorder %v189, %v258
        %vm630 = vcmp.eq.s32.totalorder %v189, %v262
        %vm631 = vcmp.eq.s32.totalorder %v190, %v202
        %vm632 = vcmp.eq.s32.totalorder %v190, %v206
        %vm633 = vcmp.eq.s32.totalorder %v190, %v210
        %vm634 = vcmp.eq.s32.totalorder %v190, %v214
        %vm635 = vcmp.eq.s32.totalorder %v190, %v218
        %vm636 = vcmp.eq.s32.totalorder %v190, %v222
        %vm637 = vcmp.eq.s32.totalorder %v190, %v226
        %vm638 = vcmp.eq.s32.totalorder %v190, %v230
        %vm639 = vcmp.eq.s32.totalorder %v190, %v234
        %vm640 = vcmp.eq.s32.totalorder %v190, %v238
        %vm641 = vcmp.eq.s32.totalorder %v190, %v242
        %vm642 = vcmp.eq.s32.totalorder %v190, %v246
        %vm643 = vcmp.eq.s32.totalorder %v190, %v250
        %vm644 = vcmp.eq.s32.totalorder %v190, %v254
        %vm645 = vcmp.eq.s32.totalorder %v190, %v258
        %vm646 = vcmp.eq.s32.totalorder %v190, %v262
        %vm647 = vcmp.eq.s32.totalorder %v191, %v202
        %vm648 = vcmp.eq.s32.totalorder %v191, %v206
        %vm649 = vcmp.eq.s32.totalorder %v191, %v210
        %vm650 = vcmp.eq.s32.totalorder %v191, %v214
        %vm651 = vcmp.eq.s32.totalorder %v191, %v218
        %vm652 = vcmp.eq.s32.totalorder %v191, %v222
        %vm653 = vcmp.eq.s32.totalorder %v191, %v226
        %vm654 = vcmp.eq.s32.totalorder %v191, %v230
        %vm655 = vcmp.eq.s32.totalorder %v191, %v234
        %vm656 = vcmp.eq.s32.totalorder %v191, %v238
        %vm657 = vcmp.eq.s32.totalorder %v191, %v242
        %vm658 = vcmp.eq.s32.totalorder %v191, %v246
        %vm659 = vcmp.eq.s32.totalorder %v191, %v250
        %vm660 = vcmp.eq.s32.totalorder %v191, %v254
        %vm661 = vcmp.eq.s32.totalorder %v191, %v258
        %vm662 = vcmp.eq.s32.totalorder %v191, %v262
        %vm663 = vcmp.eq.s32.totalorder %v192, %v202
        %vm664 = vcmp.eq.s32.totalorder %v192, %v206
        %vm665 = vcmp.eq.s32.totalorder %v192, %v210
        %vm666 = vcmp.eq.s32.totalorder %v192, %v214
        %vm667 = vcmp.eq.s32.totalorder %v192, %v218
        %vm668 = vcmp.eq.s32.totalorder %v192, %v222
        %vm669 = vcmp.eq.s32.totalorder %v192, %v226
        %vm670 = vcmp.eq.s32.totalorder %v192, %v230
        %vm671 = vcmp.eq.s32.totalorder %v192, %v234
        %vm672 = vcmp.eq.s32.totalorder %v192, %v238
        %vm673 = vcmp.eq.s32.totalorder %v192, %v242
        %vm674 = vcmp.eq.s32.totalorder %v192, %v246
        %vm675 = vcmp.eq.s32.totalorder %v192, %v250
        %vm676 = vcmp.eq.s32.totalorder %v192, %v254
        %vm677 = vcmp.eq.s32.totalorder %v192, %v258
        %vm678 = vcmp.eq.s32.totalorder %v192, %v262
        %vm679 = vcmp.eq.s32.totalorder %v193, %v202
        %vm680 = vcmp.eq.s32.totalorder %v193, %v206
        %vm681 = vcmp.eq.s32.totalorder %v193, %v210
        %vm682 = vcmp.eq.s32.totalorder %v193, %v214
        %vm683 = vcmp.eq.s32.totalorder %v193, %v218
        %vm684 = vcmp.eq.s32.totalorder %v193, %v222
        %vm685 = vcmp.eq.s32.totalorder %v193, %v226
        %vm686 = vcmp.eq.s32.totalorder %v193, %v230
        %vm687 = vcmp.eq.s32.totalorder %v193, %v234
        %vm688 = vcmp.eq.s32.totalorder %v193, %v238
        %vm689 = vcmp.eq.s32.totalorder %v193, %v242
        %vm690 = vcmp.eq.s32.totalorder %v193, %v246
        %vm691 = vcmp.eq.s32.totalorder %v193, %v250
        %vm692 = vcmp.eq.s32.totalorder %v193, %v254
        %vm693 = vcmp.eq.s32.totalorder %v193, %v258
        %vm694 = vcmp.eq.s32.totalorder %v193, %v262
        %vm695 = vcmp.eq.s32.totalorder %v194, %v202
        %vm696 = vcmp.eq.s32.totalorder %v194, %v206
        %vm697 = vcmp.eq.s32.totalorder %v194, %v210
        %vm698 = vcmp.eq.s32.totalorder %v194, %v214
        %vm699 = vcmp.eq.s32.totalorder %v194, %v218
        %vm700 = vcmp.eq.s32.totalorder %v194, %v222
        %vm701 = vcmp.eq.s32.totalorder %v194, %v226
        %vm702 = vcmp.eq.s32.totalorder %v194, %v230
        %vm703 = vcmp.eq.s32.totalorder %v194, %v234
        %vm704 = vcmp.eq.s32.totalorder %v194, %v238
        %vm705 = vcmp.eq.s32.totalorder %v194, %v242
        %vm706 = vcmp.eq.s32.totalorder %v194, %v246
        %vm707 = vcmp.eq.s32.totalorder %v194, %v250
        %vm708 = vcmp.eq.s32.totalorder %v194, %v254
        %vm709 = vcmp.eq.s32.totalorder %v194, %v258
        %vm710 = vcmp.eq.s32.totalorder %v194, %v262
        %vm711 = vcmp.eq.s32.totalorder %v195, %v202
        %vm712 = vcmp.eq.s32.totalorder %v195, %v206
        %vm713 = vcmp.eq.s32.totalorder %v195, %v210
        %vm714 = vcmp.eq.s32.totalorder %v195, %v214
        %vm715 = vcmp.eq.s32.totalorder %v195, %v218
        %vm716 = vcmp.eq.s32.totalorder %v195, %v222
        %vm717 = vcmp.eq.s32.totalorder %v195, %v226
        %vm718 = vcmp.eq.s32.totalorder %v195, %v230
        %vm719 = vcmp.eq.s32.totalorder %v195, %v234
        %vm720 = vcmp.eq.s32.totalorder %v195, %v238
        %vm721 = vcmp.eq.s32.totalorder %v195, %v242
        %vm722 = vcmp.eq.s32.totalorder %v195, %v246
        %vm723 = vcmp.eq.s32.totalorder %v195, %v250
        %vm724 = vcmp.eq.s32.totalorder %v195, %v254
        %vm725 = vcmp.eq.s32.totalorder %v195, %v258
        %vm726 = vcmp.eq.s32.totalorder %v195, %v262
        %vm727 = vcmp.eq.s32.totalorder %v196, %v202
        %vm728 = vcmp.eq.s32.totalorder %v196, %v206
        %vm729 = vcmp.eq.s32.totalorder %v196, %v210
        %vm730 = vcmp.eq.s32.totalorder %v196, %v214
        %vm731 = vcmp.eq.s32.totalorder %v196, %v218
        %vm732 = vcmp.eq.s32.totalorder %v196, %v222
        %vm733 = vcmp.eq.s32.totalorder %v196, %v226
        %vm734 = vcmp.eq.s32.totalorder %v196, %v230
        %vm735 = vcmp.eq.s32.totalorder %v196, %v234
        %vm736 = vcmp.eq.s32.totalorder %v196, %v238
        %vm737 = vcmp.eq.s32.totalorder %v196, %v242
        %vm738 = vcmp.eq.s32.totalorder %v196, %v246
        %vm739 = vcmp.eq.s32.totalorder %v196, %v250
        %vm740 = vcmp.eq.s32.totalorder %v196, %v254
        %vm741 = vcmp.eq.s32.totalorder %v196, %v258
        %vm742 = vcmp.eq.s32.totalorder %v196, %v262
        %vm743 = vcmp.eq.s32.totalorder %v197, %v202
        %vm744 = vcmp.eq.s32.totalorder %v197, %v206
        %vm745 = vcmp.eq.s32.totalorder %v197, %v210
        %vm746 = vcmp.eq.s32.totalorder %v197, %v214
        %vm747 = vcmp.eq.s32.totalorder %v197, %v218
        %vm748 = vcmp.eq.s32.totalorder %v197, %v222
        %vm749 = vcmp.eq.s32.totalorder %v197, %v226
        %vm750 = vcmp.eq.s32.totalorder %v197, %v230
        %vm751 = vcmp.eq.s32.totalorder %v197, %v234
        %vm752 = vcmp.eq.s32.totalorder %v197, %v238
        %vm753 = vcmp.eq.s32.totalorder %v197, %v242
        %vm754 = vcmp.eq.s32.totalorder %v197, %v246
        %vm755 = vcmp.eq.s32.totalorder %v197, %v250
        %vm756 = vcmp.eq.s32.totalorder %v197, %v254
        %vm757 = vcmp.eq.s32.totalorder %v197, %v258
        %vm758 = vcmp.eq.s32.totalorder %v197, %v262
        %vm759 = vcmp.eq.s32.totalorder %v198, %v202
        %vm760 = vcmp.eq.s32.totalorder %v198, %v206
        %vm761 = vcmp.eq.s32.totalorder %v198, %v210
        %vm762 = vcmp.eq.s32.totalorder %v198, %v214
        %vm763 = vcmp.eq.s32.totalorder %v198, %v218
        %vm764 = vcmp.eq.s32.totalorder %v198, %v222
        %vm765 = vcmp.eq.s32.totalorder %v198, %v226
        %vm766 = vcmp.eq.s32.totalorder %v198, %v230
        %vm767 = vcmp.eq.s32.totalorder %v198, %v234
        %vm768 = vcmp.eq.s32.totalorder %v198, %v238
        %vm769 = vcmp.eq.s32.totalorder %v198, %v242
        %vm770 = vcmp.eq.s32.totalorder %v198, %v246
        %vm771 = vcmp.eq.s32.totalorder %v198, %v250
        %vm772 = vcmp.eq.s32.totalorder %v198, %v254
        %vm773 = vcmp.eq.s32.totalorder %v198, %v258
        %vm774 = vcmp.eq.s32.totalorder %v198, %v262
        %v775 = vsel %vm263, 1, 0
        %v776 = vsel %vm264, 1, 0
        %v777 = vsel %vm265, 1, 0
        %v778 = vsel %vm266, 1, 0
        %v779 = vsel %vm267, 1, 0
        %v780 = vsel %vm268, 1, 0
        %v781 = vsel %vm269, 1, 0
        %v782 = vsel %vm270, 1, 0
        %v783 = vsel %vm271, 1, 0
        %v784 = vsel %vm272, 1, 0
        %v785 = vsel %vm273, 1, 0
        %v786 = vsel %vm274, 1, 0
        %v787 = vsel %vm275, 1, 0
        %v788 = vsel %vm276, 1, 0
        %v789 = vsel %vm277, 1, 0
        %v790 = vsel %vm278, 1, 0
        %v791 = vsel %vm279, 1, 0
        %v792 = vsel %vm280, 1, 0
        %v793 = vsel %vm281, 1, 0
        %v794 = vsel %vm282, 1, 0
        %v795 = vsel %vm283, 1, 0
        %v796 = vsel %vm284, 1, 0
        %v797 = vsel %vm285, 1, 0
        %v798 = vsel %vm286, 1, 0
        %v799 = vsel %vm287, 1, 0
        %v800 = vsel %vm288, 1, 0
        %v801 = vsel %vm289, 1, 0
        %v802 = vsel %vm290, 1, 0
        %v803 = vsel %vm291, 1, 0
        %v804 = vsel %vm292, 1, 0
        %v805 = vsel %vm293, 1, 0
        %v806 = vsel %vm294, 1, 0
        %v807 = vsel %vm295, 1, 0
        %v808 = vsel %vm296, 1, 0
        %v809 = vsel %vm297, 1, 0
        %v810 = vsel %vm298, 1, 0
        %v811 = vsel %vm299, 1, 0
        %v812 = vsel %vm300, 1, 0
        %v813 = vsel %vm301, 1, 0
        %v814 = vsel %vm302, 1, 0
        %v815 = vsel %vm303, 1, 0
        %v816 = vsel %vm304, 1, 0
        %v817 = vsel %vm305, 1, 0
        %v818 = vsel %vm306, 1, 0
        %v819 = vsel %vm307, 1, 0
        %v820 = vsel %vm308, 1, 0
        %v821 = vsel %vm309, 1, 0
        %v822 = vsel %vm310, 1, 0
        %v823 = vsel %vm311, 1, 0
        %v824 = vsel %vm312, 1, 0
        %v825 = vsel %vm313, 1, 0
        %v826 = vsel %vm314, 1, 0
        %v827 = vsel %vm315, 1, 0
        %v828 = vsel %vm316, 1, 0
        %v829 = vsel %vm317, 1, 0
        %v830 = vsel %vm318, 1, 0
        %v831 = vsel %vm319, 1, 0
        %v832 = vsel %vm320, 1, 0
        %v833 = vsel %vm321, 1, 0
        %v834 = vsel %vm322, 1, 0
        %v835 = vsel %vm323, 1, 0
        %v836 = vsel %vm324, 1, 0
        %v837 = vsel %vm325, 1, 0
        %v838 = vsel %vm326, 1, 0
        %v839 = vsel %vm327, 1, 0
        %v840 = vsel %vm328, 1, 0
        %v841 = vsel %vm329, 1, 0
        %v842 = vsel %vm330, 1, 0
        %v843 = vsel %vm331, 1, 0
        %v844 = vsel %vm332, 1, 0
        %v845 = vsel %vm333, 1, 0
        %v846 = vsel %vm334, 1, 0
        %v847 = vsel %vm335, 1, 0
        %v848 = vsel %vm336, 1, 0
        %v849 = vsel %vm337, 1, 0
        %v850 = vsel %vm338, 1, 0
        %v851 = vsel %vm339, 1, 0
        %v852 = vsel %vm340, 1, 0
        %v853 = vsel %vm341, 1, 0
        %v854 = vsel %vm342, 1, 0
        %v855 = vsel %vm343, 1, 0
        %v856 = vsel %vm344, 1, 0
        %v857 = vsel %vm345, 1, 0
        %v858 = vsel %vm346, 1, 0
        %v859 = vsel %vm347, 1, 0
        %v860 = vsel %vm348, 1, 0
        %v861 = vsel %vm349, 1, 0
        %v862 = vsel %vm350, 1, 0
        %v863 = vsel %vm351, 1, 0
        %v864 = vsel %vm352, 1, 0
        %v865 = vsel %vm353, 1, 0
        %v866 = vsel %vm354, 1, 0
        %v867 = vsel %vm355, 1, 0
        %v868 = vsel %vm356, 1, 0
        %v869 = vsel %vm357, 1, 0
        %v870 = vsel %vm358, 1, 0
        %v871 = vsel %vm359, 1, 0
        %v872 = vsel %vm360, 1, 0
        %v873 = vsel %vm361, 1, 0
        %v874 = vsel %vm362, 1, 0
        %v875 = vsel %vm363, 1, 0
        %v876 = vsel %vm364, 1, 0
        %v877 = vsel %vm365, 1, 0
        %v878 = vsel %vm366, 1, 0
        %v879 = vsel %vm367, 1, 0
        %v880 = vsel %vm368, 1, 0
        %v881 = vsel %vm369, 1, 0
        %v882 = vsel %vm370, 1, 0
        %v883 = vsel %vm371, 1, 0
        %v884 = vsel %vm372, 1, 0
        %v885 = vsel %vm373, 1, 0
        %v886 = vsel %vm374, 1, 0
        %v887 = vsel %vm375, 1, 0
        %v888 = vsel %vm376, 1, 0
        %v889 = vsel %vm377, 1, 0
        %v890 = vsel %vm378, 1, 0
        %v891 = vsel %vm379, 1, 0
        %v892 = vsel %vm380, 1, 0
        %v893 = vsel %vm381, 1, 0
        %v894 = vsel %vm382, 1, 0
        %v895 = vsel %vm383, 1, 0
        %v896 = vsel %vm384, 1, 0
        %v897 = vsel %vm385, 1, 0
        %v898 = vsel %vm386, 1, 0
        %v899 = vsel %vm387, 1, 0
        %v900 = vsel %vm388, 1, 0
        %v901 = vsel %vm389, 1, 0
        %v902 = vsel %vm390, 1, 0
        %v903 = vsel %vm391, 1, 0
        %v904 = vsel %vm392, 1, 0
        %v905 = vsel %vm393, 1, 0
        %v906 = vsel %vm394, 1, 0
        %v907 = vsel %vm395, 1, 0
        %v908 = vsel %vm396, 1, 0
        %v909 = vsel %vm397, 1, 0
        %v910 = vsel %vm398, 1, 0
        %v911 = vsel %vm399, 1, 0
        %v912 = vsel %vm400, 1, 0
        %v913 = vsel %vm401, 1, 0
        %v914 = vsel %vm402, 1, 0
        %v915 = vsel %vm403, 1, 0
        %v916 = vsel %vm404, 1, 0
        %v917 = vsel %vm405, 1, 0
        %v918 = vsel %vm406, 1, 0
        %v919 = vsel %vm407, 1, 0
        %v920 = vsel %vm408, 1, 0
        %v921 = vsel %vm409, 1, 0
        %v922 = vsel %vm410, 1, 0
        %v923 = vsel %vm411, 1, 0
        %v924 = vsel %vm412, 1, 0
        %v925 = vsel %vm413, 1, 0
        %v926 = vsel %vm414, 1, 0
        %v927 = vsel %vm415, 1, 0
        %v928 = vsel %vm416, 1, 0
        %v929 = vsel %vm417, 1, 0
        %v930 = vsel %vm418, 1, 0
        %v931 = vsel %vm419, 1, 0
        %v932 = vsel %vm420, 1, 0
        %v933 = vsel %vm421, 1, 0
        %v934 = vsel %vm422, 1, 0
        %v935 = vsel %vm423, 1, 0
        %v936 = vsel %vm424, 1, 0
        %v937 = vsel %vm425, 1, 0
        %v938 = vsel %vm426, 1, 0
        %v939 = vsel %vm427, 1, 0
        %v940 = vsel %vm428, 1, 0
        %v941 = vsel %vm429, 1, 0
        %v942 = vsel %vm430, 1, 0
        %v943 = vsel %vm431, 1, 0
        %v944 = vsel %vm432, 1, 0
        %v945 = vsel %vm433, 1, 0
        %v946 = vsel %vm434, 1, 0
        %v947 = vsel %vm435, 1, 0
        %v948 = vsel %vm436, 1, 0
        %v949 = vsel %vm437, 1, 0
        %v950 = vsel %vm438, 1, 0
        %v951 = vsel %vm439, 1, 0
        %v952 = vsel %vm440, 1, 0
        %v953 = vsel %vm441, 1, 0
        %v954 = vsel %vm442, 1, 0
        %v955 = vsel %vm443, 1, 0
        %v956 = vsel %vm444, 1, 0
        %v957 = vsel %vm445, 1, 0
        %v958 = vsel %vm446, 1, 0
        %v959 = vsel %vm447, 1, 0
        %v960 = vsel %vm448, 1, 0
        %v961 = vsel %vm449, 1, 0
        %v962 = vsel %vm450, 1, 0
        %v963 = vsel %vm451, 1, 0
        %v964 = vsel %vm452, 1, 0
        %v965 = vsel %vm453, 1, 0
        %v966 = vsel %vm454, 1, 0
        %v967 = vsel %vm455, 1, 0
        %v968 = vsel %vm456, 1, 0
        %v969 = vsel %vm457, 1, 0
        %v970 = vsel %vm458, 1, 0
        %v971 = vsel %vm459, 1, 0
        %v972 = vsel %vm460, 1, 0
        %v973 = vsel %vm461, 1, 0
        %v974 = vsel %vm462, 1, 0
        %v975 = vsel %vm463, 1, 0
        %v976 = vsel %vm464, 1, 0
        %v977 = vsel %vm465, 1, 0
        %v978 = vsel %vm466, 1, 0
        %v979 = vsel %vm467, 1, 0
        %v980 = vsel %vm468, 1, 0
        %v981 = vsel %vm469, 1, 0
        %v982 = vsel %vm470, 1, 0
        %v983 = vsel %vm471, 1, 0
        %v984 = vsel %vm472, 1, 0
        %v985 = vsel %vm473, 1, 0
        %v986 = vsel %vm474, 1, 0
        %v987 = vsel %vm475, 1, 0
        %v988 = vsel %vm476, 1, 0
        %v989 = vsel %vm477, 1, 0
        %v990 = vsel %vm478, 1, 0
        %v991 = vsel %vm479, 1, 0
        %v992 = vsel %vm480, 1, 0
        %v993 = vsel %vm481, 1, 0
        %v994 = vsel %vm482, 1, 0
        %v995 = vsel %vm483, 1, 0
        %v996 = vsel %vm484, 1, 0
        %v997 = vsel %vm485, 1, 0
        %v998 = vsel %vm486, 1, 0
        %v999 = vsel %vm487, 1, 0
        %v1000 = vsel %vm488, 1, 0
        %v1001 = vsel %vm489, 1, 0
        %v1002 = vsel %vm490, 1, 0
        %v1003 = vsel %vm491, 1, 0
        %v1004 = vsel %vm492, 1, 0
        %v1005 = vsel %vm493, 1, 0
        %v1006 = vsel %vm494, 1, 0
        %v1007 = vsel %vm495, 1, 0
        %v1008 = vsel %vm496, 1, 0
        %v1009 = vsel %vm497, 1, 0
        %v1010 = vsel %vm498, 1, 0
        %v1011 = vsel %vm499, 1, 0
        %v1012 = vsel %vm500, 1, 0
        %v1013 = vsel %vm501, 1, 0
        %v1014 = vsel %vm502, 1, 0
        %v1015 = vsel %vm503, 1, 0
        %v1016 = vsel %vm504, 1, 0
        %v1017 = vsel %vm505, 1, 0
        %v1018 = vsel %vm506, 1, 0
        %v1019 = vsel %vm507, 1, 0
        %v1020 = vsel %vm508, 1, 0
        %v1021 = vsel %vm509, 1, 0
        %v1022 = vsel %vm510, 1, 0
        %v1023 = vsel %vm511, 1, 0
        %v1024 = vsel %vm512, 1, 0
        %v1025 = vsel %vm513, 1, 0
        %v1026 = vsel %vm514, 1, 0
        %v1027 = vsel %vm515, 1, 0
        %v1028 = vsel %vm516, 1, 0
        %v1029 = vsel %vm517, 1, 0
        %v1030 = vsel %vm518, 1, 0
        %v1031 = vsel %vm519, 1, 0
        %v1032 = vsel %vm520, 1, 0
        %v1033 = vsel %vm521, 1, 0
        %v1034 = vsel %vm522, 1, 0
        %v1035 = vsel %vm523, 1, 0
        %v1036 = vsel %vm524, 1, 0
        %v1037 = vsel %vm525, 1, 0
        %v1038 = vsel %vm526, 1, 0
        %v1039 = vsel %vm527, 1, 0
        %v1040 = vsel %vm528, 1, 0
        %v1041 = vsel %vm529, 1, 0
        %v1042 = vsel %vm530, 1, 0
        %v1043 = vsel %vm531, 1, 0
        %v1044 = vsel %vm532, 1, 0
        %v1045 = vsel %vm533, 1, 0
        %v1046 = vsel %vm534, 1, 0
        %v1047 = vsel %vm535, 1, 0
        %v1048 = vsel %vm536, 1, 0
        %v1049 = vsel %vm537, 1, 0
        %v1050 = vsel %vm538, 1, 0
        %v1051 = vsel %vm539, 1, 0
        %v1052 = vsel %vm540, 1, 0
        %v1053 = vsel %vm541, 1, 0
        %v1054 = vsel %vm542, 1, 0
        %v1055 = vsel %vm543, 1, 0
        %v1056 = vsel %vm544, 1, 0
        %v1057 = vsel %vm545, 1, 0
        %v1058 = vsel %vm546, 1, 0
        %v1059 = vsel %vm547, 1, 0
        %v1060 = vsel %vm548, 1, 0
        %v1061 = vsel %vm549, 1, 0
        %v1062 = vsel %vm550, 1, 0
        %v1063 = vsel %vm551, 1, 0
        %v1064 = vsel %vm552, 1, 0
        %v1065 = vsel %vm553, 1, 0
        %v1066 = vsel %vm554, 1, 0
        %v1067 = vsel %vm555, 1, 0
        %v1068 = vsel %vm556, 1, 0
        %v1069 = vsel %vm557, 1, 0
        %v1070 = vsel %vm558, 1, 0
        %v1071 = vsel %vm559, 1, 0
        %v1072 = vsel %vm560, 1, 0
        %v1073 = vsel %vm561, 1, 0
        %v1074 = vsel %vm562, 1, 0
        %v1075 = vsel %vm563, 1, 0
        %v1076 = vsel %vm564, 1, 0
        %v1077 = vsel %vm565, 1, 0
        %v1078 = vsel %vm566, 1, 0
        %v1079 = vsel %vm567, 1, 0
        %v1080 = vsel %vm568, 1, 0
        %v1081 = vsel %vm569, 1, 0
        %v1082 = vsel %vm570, 1, 0
        %v1083 = vsel %vm571, 1, 0
        %v1084 = vsel %vm572, 1, 0
        %v1085 = vsel %vm573, 1, 0
        %v1086 = vsel %vm574, 1, 0
        %v1087 = vsel %vm575, 1, 0
        %v1088 = vsel %vm576, 1, 0
        %v1089 = vsel %vm577, 1, 0
        %v1090 = vsel %vm578, 1, 0
        %v1091 = vsel %vm579, 1, 0
        %v1092 = vsel %vm580, 1, 0
        %v1093 = vsel %vm581, 1, 0
        %v1094 = vsel %vm582, 1, 0
        %v1095 = vsel %vm583, 1, 0
        %v1096 = vsel %vm584, 1, 0
        %v1097 = vsel %vm585, 1, 0
        %v1098 = vsel %vm586, 1, 0
        %v1099 = vsel %vm587, 1, 0
        %v1100 = vsel %vm588, 1, 0
        %v1101 = vsel %vm589, 1, 0
        %v1102 = vsel %vm590, 1, 0
        %v1103 = vsel %vm591, 1, 0
        %v1104 = vsel %vm592, 1, 0
        %v1105 = vsel %vm593, 1, 0
        %v1106 = vsel %vm594, 1, 0
        %v1107 = vsel %vm595, 1, 0
        %v1108 = vsel %vm596, 1, 0
        %v1109 = vsel %vm597, 1, 0
        %v1110 = vsel %vm598, 1, 0
        %v1111 = vsel %vm599, 1, 0
        %v1112 = vsel %vm600, 1, 0
        %v1113 = vsel %vm601, 1, 0
        %v1114 = vsel %vm602, 1, 0
        %v1115 = vsel %vm603, 1, 0
        %v1116 = vsel %vm604, 1, 0
        %v1117 = vsel %vm605, 1, 0
        %v1118 = vsel %vm606, 1, 0
        %v1119 = vsel %vm607, 1, 0
        %v1120 = vsel %vm608, 1, 0
        %v1121 = vsel %vm609, 1, 0
        %v1122 = vsel %vm610, 1, 0
        %v1123 = vsel %vm611, 1, 0
        %v1124 = vsel %vm612, 1, 0
        %v1125 = vsel %vm613, 1, 0
        %v1126 = vsel %vm614, 1, 0
        %v1127 = vsel %vm615, 1, 0
        %v1128 = vsel %vm616, 1, 0
        %v1129 = vsel %vm617, 1, 0
        %v1130 = vsel %vm618, 1, 0
        %v1131 = vsel %vm619, 1, 0
        %v1132 = vsel %vm620, 1, 0
        %v1133 = vsel %vm621, 1, 0
        %v1134 = vsel %vm622, 1, 0
        %v1135 = vsel %vm623, 1, 0
        %v1136 = vsel %vm624, 1, 0
        %v1137 = vsel %vm625, 1, 0
        %v1138 = vsel %vm626, 1, 0
        %v1139 = vsel %vm627, 1, 0
        %v1140 = vsel %vm628, 1, 0
        %v1141 = vsel %vm629, 1, 0
        %v1142 = vsel %vm630, 1, 0
        %v1143 = vsel %vm631, 1, 0
        %v1144 = vsel %vm632, 1, 0
        %v1145 = vsel %vm633, 1, 0
        %v1146 = vsel %vm634, 1, 0
        %v1147 = vsel %vm635, 1, 0
        %v1148 = vsel %vm636, 1, 0
        %v1149 = vsel %vm637, 1, 0
        %v1150 = vsel %vm638, 1, 0
        %v1151 = vsel %vm639, 1, 0
        %v1152 = vsel %vm640, 1, 0
        %v1153 = vsel %vm641, 1, 0
        %v1154 = vsel %vm642, 1, 0
        %v1155 = vsel %vm643, 1, 0
        %v1156 = vsel %vm644, 1, 0
        %v1157 = vsel %vm645, 1, 0
        %v1158 = vsel %vm646, 1, 0
        %v1159 = vsel %vm647, 1, 0
        %v1160 = vsel %vm648, 1, 0
        %v1161 = vsel %vm649, 1, 0
        %v1162 = vsel %vm650, 1, 0
        %v1163 = vsel %vm651, 1, 0
        %v1164 = vsel %vm652, 1, 0
        %v1165 = vsel %vm653, 1, 0
        %v1166 = vsel %vm654, 1, 0
        %v1167 = vsel %vm655, 1, 0
        %v1168 = vsel %vm656, 1, 0
        %v1169 = vsel %vm657, 1, 0
        %v1170 = vsel %vm658, 1, 0
        %v1171 = vsel %vm659, 1, 0
        %v1172 = vsel %vm660, 1, 0
        %v1173 = vsel %vm661, 1, 0
        %v1174 = vsel %vm662, 1, 0
        %v1175 = vsel %vm663, 1, 0
        %v1176 = vsel %vm664, 1, 0
        %v1177 = vsel %vm665, 1, 0
        %v1178 = vsel %vm666, 1, 0
        %v1179 = vsel %vm667, 1, 0
        %v1180 = vsel %vm668, 1, 0
        %v1181 = vsel %vm669, 1, 0
        %v1182 = vsel %vm670, 1, 0
        %v1183 = vsel %vm671, 1, 0
        %v1184 = vsel %vm672, 1, 0
        %v1185 = vsel %vm673, 1, 0
        %v1186 = vsel %vm674, 1, 0
        %v1187 = vsel %vm675, 1, 0
        %v1188 = vsel %vm676, 1, 0
        %v1189 = vsel %vm677, 1, 0
        %v1190 = vsel %vm678, 1, 0
        %v1191 = vsel %vm679, 1, 0
        %v1192 = vsel %vm680, 1, 0
        %v1193 = vsel %vm681, 1, 0
        %v1194 = vsel %vm682, 1, 0
        %v1195 = vsel %vm683, 1, 0
        %v1196 = vsel %vm684, 1, 0
        %v1197 = vsel %vm685, 1, 0
        %v1198 = vsel %vm686, 1, 0
        %v1199 = vsel %vm687, 1, 0
        %v1200 = vsel %vm688, 1, 0
        %v1201 = vsel %vm689, 1, 0
        %v1202 = vsel %vm690, 1, 0
        %v1203 = vsel %vm691, 1, 0
        %v1204 = vsel %vm692, 1, 0
        %v1205 = vsel %vm693, 1, 0
        %v1206 = vsel %vm694, 1, 0
        %v1207 = vsel %vm695, 1, 0
        %v1208 = vsel %vm696, 1, 0
        %v1209 = vsel %vm697, 1, 0
        %v1210 = vsel %vm698, 1, 0
        %v1211 = vsel %vm699, 1, 0
        %v1212 = vsel %vm700, 1, 0
        %v1213 = vsel %vm701, 1, 0
        %v1214 = vsel %vm702, 1, 0
        %v1215 = vsel %vm703, 1, 0
        %v1216 = vsel %vm704, 1, 0
        %v1217 = vsel %vm705, 1, 0
        %v1218 = vsel %vm706, 1, 0
        %v1219 = vsel %vm707, 1, 0
        %v1220 = vsel %vm708, 1, 0
        %v1221 = vsel %vm709, 1, 0
        %v1222 = vsel %vm710, 1, 0
        %v1223 = vsel %vm711, 1, 0
        %v1224 = vsel %vm712, 1, 0
        %v1225 = vsel %vm713, 1, 0
        %v1226 = vsel %vm714, 1, 0
        %v1227 = vsel %vm715, 1, 0
        %v1228 = vsel %vm716, 1, 0
        %v1229 = vsel %vm717, 1, 0
        %v1230 = vsel %vm718, 1, 0
        %v1231 = vsel %vm719, 1, 0
        %v1232 = vsel %vm720, 1, 0
        %v1233 = vsel %vm721, 1, 0
        %v1234 = vsel %vm722, 1, 0
        %v1235 = vsel %vm723, 1, 0
        %v1236 = vsel %vm724, 1, 0
        %v1237 = vsel %vm725, 1, 0
        %v1238 = vsel %vm726, 1, 0
        %v1239 = vsel %vm727, 1, 0
        %v1240 = vsel %vm728, 1, 0
        %v1241 = vsel %vm729, 1, 0
        %v1242 = vsel %vm730, 1, 0
        %v1243 = vsel %vm731, 1, 0
        %v1244 = vsel %vm732, 1, 0
        %v1245 = vsel %vm733, 1, 0
        %v1246 = vsel %vm734, 1, 0
        %v1247 = vsel %vm735, 1, 0
        %v1248 = vsel %vm736, 1, 0
        %v1249 = vsel %vm737, 1, 0
        %v1250 = vsel %vm738, 1, 0
        %v1251 = vsel %vm739, 1, 0
        %v1252 = vsel %vm740, 1, 0
        %v1253 = vsel %vm741, 1, 0
        %v1254 = vsel %vm742, 1, 0
        %v1255 = vsel %vm743, 1, 0
        %v1256 = vsel %vm744, 1, 0
        %v1257 = vsel %vm745, 1, 0
        %v1258 = vsel %vm746, 1, 0
        %v1259 = vsel %vm747, 1, 0
        %v1260 = vsel %vm748, 1, 0
        %v1261 = vsel %vm749, 1, 0
        %v1262 = vsel %vm750, 1, 0
        %v1263 = vsel %vm751, 1, 0
        %v1264 = vsel %vm752, 1, 0
        %v1265 = vsel %vm753, 1, 0
        %v1266 = vsel %vm754, 1, 0
        %v1267 = vsel %vm755, 1, 0
        %v1268 = vsel %vm756, 1, 0
        %v1269 = vsel %vm757, 1, 0
        %v1270 = vsel %vm758, 1, 0
        %v1271 = vsel %vm759, 1, 0
        %v1272 = vsel %vm760, 1, 0
        %v1273 = vsel %vm761, 1, 0
        %v1274 = vsel %vm762, 1, 0
        %v1275 = vsel %vm763, 1, 0
        %v1276 = vsel %vm764, 1, 0
        %v1277 = vsel %vm765, 1, 0
        %v1278 = vsel %vm766, 1, 0
        %v1279 = vsel %vm767, 1, 0
        %v1280 = vsel %vm768, 1, 0
        %v1281 = vsel %vm769, 1, 0
        %v1282 = vsel %vm770, 1, 0
        %v1283 = vsel %vm771, 1, 0
        %v1284 = vsel %vm772, 1, 0
        %v1285 = vsel %vm773, 1, 0
        %v1286 = vsel %vm774, 1, 0
        %v1287 = vcvt.s32.f32 %v775
        %v1288 = vcvt.s32.f32 %v776
        %v1289 = vcvt.s32.f32 %v777
        %v1290 = vcvt.s32.f32 %v778
        %v1291 = vcvt.s32.f32 %v779
        %v1292 = vcvt.s32.f32 %v780
        %v1293 = vcvt.s32.f32 %v781
        %v1294 = vcvt.s32.f32 %v782
        %v1295 = vcvt.s32.f32 %v783
        %v1296 = vcvt.s32.f32 %v784
        %v1297 = vcvt.s32.f32 %v785
        %v1298 = vcvt.s32.f32 %v786
        %v1299 = vcvt.s32.f32 %v787
        %v1300 = vcvt.s32.f32 %v788
        %v1301 = vcvt.s32.f32 %v789
        %v1302 = vcvt.s32.f32 %v790
        %v1303 = vcvt.s32.f32 %v791
        %v1304 = vcvt.s32.f32 %v792
        %v1305 = vcvt.s32.f32 %v793
        %v1306 = vcvt.s32.f32 %v794
        %v1307 = vcvt.s32.f32 %v795
        %v1308 = vcvt.s32.f32 %v796
        %v1309 = vcvt.s32.f32 %v797
        %v1310 = vcvt.s32.f32 %v798
        %v1311 = vcvt.s32.f32 %v799
        %v1312 = vcvt.s32.f32 %v800
        %v1313 = vcvt.s32.f32 %v801
        %v1314 = vcvt.s32.f32 %v802
        %v1315 = vcvt.s32.f32 %v803
        %v1316 = vcvt.s32.f32 %v804
        %v1317 = vcvt.s32.f32 %v805
        %v1318 = vcvt.s32.f32 %v806
        %v1319 = vcvt.s32.f32 %v807
        %v1320 = vcvt.s32.f32 %v808
        %v1321 = vcvt.s32.f32 %v809
        %v1322 = vcvt.s32.f32 %v810
        %v1323 = vcvt.s32.f32 %v811
        %v1324 = vcvt.s32.f32 %v812
        %v1325 = vcvt.s32.f32 %v813
        %v1326 = vcvt.s32.f32 %v814
        %v1327 = vcvt.s32.f32 %v815
        %v1328 = vcvt.s32.f32 %v816
        %v1329 = vcvt.s32.f32 %v817
        %v1330 = vcvt.s32.f32 %v818
        %v1331 = vcvt.s32.f32 %v819
        %v1332 = vcvt.s32.f32 %v820
        %v1333 = vcvt.s32.f32 %v821
        %v1334 = vcvt.s32.f32 %v822
        %v1335 = vcvt.s32.f32 %v823
        %v1336 = vcvt.s32.f32 %v824
        %v1337 = vcvt.s32.f32 %v825
        %v1338 = vcvt.s32.f32 %v826
        %v1339 = vcvt.s32.f32 %v827
        %v1340 = vcvt.s32.f32 %v828
        %v1341 = vcvt.s32.f32 %v829
        %v1342 = vcvt.s32.f32 %v830
        %v1343 = vcvt.s32.f32 %v831
        %v1344 = vcvt.s32.f32 %v832
        %v1345 = vcvt.s32.f32 %v833
        %v1346 = vcvt.s32.f32 %v834
        %v1347 = vcvt.s32.f32 %v835
        %v1348 = vcvt.s32.f32 %v836
        %v1349 = vcvt.s32.f32 %v837
        %v1350 = vcvt.s32.f32 %v838
        %v1351 = vcvt.s32.f32 %v839
        %v1352 = vcvt.s32.f32 %v840
        %v1353 = vcvt.s32.f32 %v841
        %v1354 = vcvt.s32.f32 %v842
        %v1355 = vcvt.s32.f32 %v843
        %v1356 = vcvt.s32.f32 %v844
        %v1357 = vcvt.s32.f32 %v845
        %v1358 = vcvt.s32.f32 %v846
        %v1359 = vcvt.s32.f32 %v847
        %v1360 = vcvt.s32.f32 %v848
        %v1361 = vcvt.s32.f32 %v849
        %v1362 = vcvt.s32.f32 %v850
        %v1363 = vcvt.s32.f32 %v851
        %v1364 = vcvt.s32.f32 %v852
        %v1365 = vcvt.s32.f32 %v853
        %v1366 = vcvt.s32.f32 %v854
        %v1367 = vcvt.s32.f32 %v855
        %v1368 = vcvt.s32.f32 %v856
        %v1369 = vcvt.s32.f32 %v857
        %v1370 = vcvt.s32.f32 %v858
        %v1371 = vcvt.s32.f32 %v859
        %v1372 = vcvt.s32.f32 %v860
        %v1373 = vcvt.s32.f32 %v861
        %v1374 = vcvt.s32.f32 %v862
        %v1375 = vcvt.s32.f32 %v863
        %v1376 = vcvt.s32.f32 %v864
        %v1377 = vcvt.s32.f32 %v865
        %v1378 = vcvt.s32.f32 %v866
        %v1379 = vcvt.s32.f32 %v867
        %v1380 = vcvt.s32.f32 %v868
        %v1381 = vcvt.s32.f32 %v869
        %v1382 = vcvt.s32.f32 %v870
        %v1383 = vcvt.s32.f32 %v871
        %v1384 = vcvt.s32.f32 %v872
        %v1385 = vcvt.s32.f32 %v873
        %v1386 = vcvt.s32.f32 %v874
        %v1387 = vcvt.s32.f32 %v875
        %v1388 = vcvt.s32.f32 %v876
        %v1389 = vcvt.s32.f32 %v877
        %v1390 = vcvt.s32.f32 %v878
        %v1391 = vcvt.s32.f32 %v879
        %v1392 = vcvt.s32.f32 %v880
        %v1393 = vcvt.s32.f32 %v881
        %v1394 = vcvt.s32.f32 %v882
        %v1395 = vcvt.s32.f32 %v883
        %v1396 = vcvt.s32.f32 %v884
        %v1397 = vcvt.s32.f32 %v885
        %v1398 = vcvt.s32.f32 %v886
        %v1399 = vcvt.s32.f32 %v887
        %v1400 = vcvt.s32.f32 %v888
        %v1401 = vcvt.s32.f32 %v889
        %v1402 = vcvt.s32.f32 %v890
        %v1403 = vcvt.s32.f32 %v891
        %v1404 = vcvt.s32.f32 %v892
        %v1405 = vcvt.s32.f32 %v893
        %v1406 = vcvt.s32.f32 %v894
        %v1407 = vcvt.s32.f32 %v895
        %v1408 = vcvt.s32.f32 %v896
        %v1409 = vcvt.s32.f32 %v897
        %v1410 = vcvt.s32.f32 %v898
        %v1411 = vcvt.s32.f32 %v899
        %v1412 = vcvt.s32.f32 %v900
        %v1413 = vcvt.s32.f32 %v901
        %v1414 = vcvt.s32.f32 %v902
        %v1415 = vcvt.s32.f32 %v903
        %v1416 = vcvt.s32.f32 %v904
        %v1417 = vcvt.s32.f32 %v905
        %v1418 = vcvt.s32.f32 %v906
        %v1419 = vcvt.s32.f32 %v907
        %v1420 = vcvt.s32.f32 %v908
        %v1421 = vcvt.s32.f32 %v909
        %v1422 = vcvt.s32.f32 %v910
        %v1423 = vcvt.s32.f32 %v911
        %v1424 = vcvt.s32.f32 %v912
        %v1425 = vcvt.s32.f32 %v913
        %v1426 = vcvt.s32.f32 %v914
        %v1427 = vcvt.s32.f32 %v915
        %v1428 = vcvt.s32.f32 %v916
        %v1429 = vcvt.s32.f32 %v917
        %v1430 = vcvt.s32.f32 %v918
        %v1431 = vcvt.s32.f32 %v919
        %v1432 = vcvt.s32.f32 %v920
        %v1433 = vcvt.s32.f32 %v921
        %v1434 = vcvt.s32.f32 %v922
        %v1435 = vcvt.s32.f32 %v923
        %v1436 = vcvt.s32.f32 %v924
        %v1437 = vcvt.s32.f32 %v925
        %v1438 = vcvt.s32.f32 %v926
        %v1439 = vcvt.s32.f32 %v927
        %v1440 = vcvt.s32.f32 %v928
        %v1441 = vcvt.s32.f32 %v929
        %v1442 = vcvt.s32.f32 %v930
        %v1443 = vcvt.s32.f32 %v931
        %v1444 = vcvt.s32.f32 %v932
        %v1445 = vcvt.s32.f32 %v933
        %v1446 = vcvt.s32.f32 %v934
        %v1447 = vcvt.s32.f32 %v935
        %v1448 = vcvt.s32.f32 %v936
        %v1449 = vcvt.s32.f32 %v937
        %v1450 = vcvt.s32.f32 %v938
        %v1451 = vcvt.s32.f32 %v939
        %v1452 = vcvt.s32.f32 %v940
        %v1453 = vcvt.s32.f32 %v941
        %v1454 = vcvt.s32.f32 %v942
        %v1455 = vcvt.s32.f32 %v943
        %v1456 = vcvt.s32.f32 %v944
        %v1457 = vcvt.s32.f32 %v945
        %v1458 = vcvt.s32.f32 %v946
        %v1459 = vcvt.s32.f32 %v947
        %v1460 = vcvt.s32.f32 %v948
        %v1461 = vcvt.s32.f32 %v949
        %v1462 = vcvt.s32.f32 %v950
        %v1463 = vcvt.s32.f32 %v951
        %v1464 = vcvt.s32.f32 %v952
        %v1465 = vcvt.s32.f32 %v953
        %v1466 = vcvt.s32.f32 %v954
        %v1467 = vcvt.s32.f32 %v955
        %v1468 = vcvt.s32.f32 %v956
        %v1469 = vcvt.s32.f32 %v957
        %v1470 = vcvt.s32.f32 %v958
        %v1471 = vcvt.s32.f32 %v959
        %v1472 = vcvt.s32.f32 %v960
        %v1473 = vcvt.s32.f32 %v961
        %v1474 = vcvt.s32.f32 %v962
        %v1475 = vcvt.s32.f32 %v963
        %v1476 = vcvt.s32.f32 %v964
        %v1477 = vcvt.s32.f32 %v965
        %v1478 = vcvt.s32.f32 %v966
        %v1479 = vcvt.s32.f32 %v967
        %v1480 = vcvt.s32.f32 %v968
        %v1481 = vcvt.s32.f32 %v969
        %v1482 = vcvt.s32.f32 %v970
        %v1483 = vcvt.s32.f32 %v971
        %v1484 = vcvt.s32.f32 %v972
        %v1485 = vcvt.s32.f32 %v973
        %v1486 = vcvt.s32.f32 %v974
        %v1487 = vcvt.s32.f32 %v975
        %v1488 = vcvt.s32.f32 %v976
        %v1489 = vcvt.s32.f32 %v977
        %v1490 = vcvt.s32.f32 %v978
        %v1491 = vcvt.s32.f32 %v979
        %v1492 = vcvt.s32.f32 %v980
        %v1493 = vcvt.s32.f32 %v981
        %v1494 = vcvt.s32.f32 %v982
        %v1495 = vcvt.s32.f32 %v983
        %v1496 = vcvt.s32.f32 %v984
        %v1497 = vcvt.s32.f32 %v985
        %v1498 = vcvt.s32.f32 %v986
        %v1499 = vcvt.s32.f32 %v987
        %v1500 = vcvt.s32.f32 %v988
        %v1501 = vcvt.s32.f32 %v989
        %v1502 = vcvt.s32.f32 %v990
        %v1503 = vcvt.s32.f32 %v991
        %v1504 = vcvt.s32.f32 %v992
        %v1505 = vcvt.s32.f32 %v993
        %v1506 = vcvt.s32.f32 %v994
        %v1507 = vcvt.s32.f32 %v995
        %v1508 = vcvt.s32.f32 %v996
        %v1509 = vcvt.s32.f32 %v997
        %v1510 = vcvt.s32.f32 %v998
        %v1511 = vcvt.s32.f32 %v999
        %v1512 = vcvt.s32.f32 %v1000
        %v1513 = vcvt.s32.f32 %v1001
        %v1514 = vcvt.s32.f32 %v1002
        %v1515 = vcvt.s32.f32 %v1003
        %v1516 = vcvt.s32.f32 %v1004
        %v1517 = vcvt.s32.f32 %v1005
        %v1518 = vcvt.s32.f32 %v1006
        %v1519 = vcvt.s32.f32 %v1007
        %v1520 = vcvt.s32.f32 %v1008
        %v1521 = vcvt.s32.f32 %v1009
        %v1522 = vcvt.s32.f32 %v1010
        %v1523 = vcvt.s32.f32 %v1011
        %v1524 = vcvt.s32.f32 %v1012
        %v1525 = vcvt.s32.f32 %v1013
        %v1526 = vcvt.s32.f32 %v1014
        %v1527 = vcvt.s32.f32 %v1015
        %v1528 = vcvt.s32.f32 %v1016
        %v1529 = vcvt.s32.f32 %v1017
        %v1530 = vcvt.s32.f32 %v1018
        %v1531 = vcvt.s32.f32 %v1019
        %v1532 = vcvt.s32.f32 %v1020
        %v1533 = vcvt.s32.f32 %v1021
        %v1534 = vcvt.s32.f32 %v1022
        %v1535 = vcvt.s32.f32 %v1023
        %v1536 = vcvt.s32.f32 %v1024
        %v1537 = vcvt.s32.f32 %v1025
        %v1538 = vcvt.s32.f32 %v1026
        %v1539 = vcvt.s32.f32 %v1027
        %v1540 = vcvt.s32.f32 %v1028
        %v1541 = vcvt.s32.f32 %v1029
        %v1542 = vcvt.s32.f32 %v1030
        %v1543 = vcvt.s32.f32 %v1031
        %v1544 = vcvt.s32.f32 %v1032
        %v1545 = vcvt.s32.f32 %v1033
        %v1546 = vcvt.s32.f32 %v1034
        %v1547 = vcvt.s32.f32 %v1035
        %v1548 = vcvt.s32.f32 %v1036
        %v1549 = vcvt.s32.f32 %v1037
        %v1550 = vcvt.s32.f32 %v1038
        %v1551 = vcvt.s32.f32 %v1039
        %v1552 = vcvt.s32.f32 %v1040
        %v1553 = vcvt.s32.f32 %v1041
        %v1554 = vcvt.s32.f32 %v1042
        %v1555 = vcvt.s32.f32 %v1043
        %v1556 = vcvt.s32.f32 %v1044
        %v1557 = vcvt.s32.f32 %v1045
        %v1558 = vcvt.s32.f32 %v1046
        %v1559 = vcvt.s32.f32 %v1047
        %v1560 = vcvt.s32.f32 %v1048
        %v1561 = vcvt.s32.f32 %v1049
        %v1562 = vcvt.s32.f32 %v1050
        %v1563 = vcvt.s32.f32 %v1051
        %v1564 = vcvt.s32.f32 %v1052
        %v1565 = vcvt.s32.f32 %v1053
        %v1566 = vcvt.s32.f32 %v1054
        %v1567 = vcvt.s32.f32 %v1055
        %v1568 = vcvt.s32.f32 %v1056
        %v1569 = vcvt.s32.f32 %v1057
        %v1570 = vcvt.s32.f32 %v1058
        %v1571 = vcvt.s32.f32 %v1059
        %v1572 = vcvt.s32.f32 %v1060
        %v1573 = vcvt.s32.f32 %v1061
        %v1574 = vcvt.s32.f32 %v1062
        %v1575 = vcvt.s32.f32 %v1063
        %v1576 = vcvt.s32.f32 %v1064
        %v1577 = vcvt.s32.f32 %v1065
        %v1578 = vcvt.s32.f32 %v1066
        %v1579 = vcvt.s32.f32 %v1067
        %v1580 = vcvt.s32.f32 %v1068
        %v1581 = vcvt.s32.f32 %v1069
        %v1582 = vcvt.s32.f32 %v1070
        %v1583 = vcvt.s32.f32 %v1071
        %v1584 = vcvt.s32.f32 %v1072
        %v1585 = vcvt.s32.f32 %v1073
        %v1586 = vcvt.s32.f32 %v1074
        %v1587 = vcvt.s32.f32 %v1075
        %v1588 = vcvt.s32.f32 %v1076
        %v1589 = vcvt.s32.f32 %v1077
        %v1590 = vcvt.s32.f32 %v1078
        %v1591 = vcvt.s32.f32 %v1079
        %v1592 = vcvt.s32.f32 %v1080
        %v1593 = vcvt.s32.f32 %v1081
        %v1594 = vcvt.s32.f32 %v1082
        %v1595 = vcvt.s32.f32 %v1083
        %v1596 = vcvt.s32.f32 %v1084
        %v1597 = vcvt.s32.f32 %v1085
        %v1598 = vcvt.s32.f32 %v1086
        %v1599 = vcvt.s32.f32 %v1087
        %v1600 = vcvt.s32.f32 %v1088
        %v1601 = vcvt.s32.f32 %v1089
        %v1602 = vcvt.s32.f32 %v1090
        %v1603 = vcvt.s32.f32 %v1091
        %v1604 = vcvt.s32.f32 %v1092
        %v1605 = vcvt.s32.f32 %v1093
        %v1606 = vcvt.s32.f32 %v1094
        %v1607 = vcvt.s32.f32 %v1095
        %v1608 = vcvt.s32.f32 %v1096
        %v1609 = vcvt.s32.f32 %v1097
        %v1610 = vcvt.s32.f32 %v1098
        %v1611 = vcvt.s32.f32 %v1099
        %v1612 = vcvt.s32.f32 %v1100
        %v1613 = vcvt.s32.f32 %v1101
        %v1614 = vcvt.s32.f32 %v1102
        %v1615 = vcvt.s32.f32 %v1103
        %v1616 = vcvt.s32.f32 %v1104
        %v1617 = vcvt.s32.f32 %v1105
        %v1618 = vcvt.s32.f32 %v1106
        %v1619 = vcvt.s32.f32 %v1107
        %v1620 = vcvt.s32.f32 %v1108
        %v1621 = vcvt.s32.f32 %v1109
        %v1622 = vcvt.s32.f32 %v1110
        %v1623 = vcvt.s32.f32 %v1111
        %v1624 = vcvt.s32.f32 %v1112
        %v1625 = vcvt.s32.f32 %v1113
        %v1626 = vcvt.s32.f32 %v1114
        %v1627 = vcvt.s32.f32 %v1115
        %v1628 = vcvt.s32.f32 %v1116
        %v1629 = vcvt.s32.f32 %v1117
        %v1630 = vcvt.s32.f32 %v1118
        %v1631 = vcvt.s32.f32 %v1119
        %v1632 = vcvt.s32.f32 %v1120
        %v1633 = vcvt.s32.f32 %v1121
        %v1634 = vcvt.s32.f32 %v1122
        %v1635 = vcvt.s32.f32 %v1123
        %v1636 = vcvt.s32.f32 %v1124
        %v1637 = vcvt.s32.f32 %v1125
        %v1638 = vcvt.s32.f32 %v1126
        %v1639 = vcvt.s32.f32 %v1127
        %v1640 = vcvt.s32.f32 %v1128
        %v1641 = vcvt.s32.f32 %v1129
        %v1642 = vcvt.s32.f32 %v1130
        %v1643 = vcvt.s32.f32 %v1131
        %v1644 = vcvt.s32.f32 %v1132
        %v1645 = vcvt.s32.f32 %v1133
        %v1646 = vcvt.s32.f32 %v1134
        %v1647 = vcvt.s32.f32 %v1135
        %v1648 = vcvt.s32.f32 %v1136
        %v1649 = vcvt.s32.f32 %v1137
        %v1650 = vcvt.s32.f32 %v1138
        %v1651 = vcvt.s32.f32 %v1139
        %v1652 = vcvt.s32.f32 %v1140
        %v1653 = vcvt.s32.f32 %v1141
        %v1654 = vcvt.s32.f32 %v1142
        %v1655 = vcvt.s32.f32 %v1143
        %v1656 = vcvt.s32.f32 %v1144
        %v1657 = vcvt.s32.f32 %v1145
        %v1658 = vcvt.s32.f32 %v1146
        %v1659 = vcvt.s32.f32 %v1147
        %v1660 = vcvt.s32.f32 %v1148
        %v1661 = vcvt.s32.f32 %v1149
        %v1662 = vcvt.s32.f32 %v1150
        %v1663 = vcvt.s32.f32 %v1151
        %v1664 = vcvt.s32.f32 %v1152
        %v1665 = vcvt.s32.f32 %v1153
        %v1666 = vcvt.s32.f32 %v1154
        %v1667 = vcvt.s32.f32 %v1155
        %v1668 = vcvt.s32.f32 %v1156
        %v1669 = vcvt.s32.f32 %v1157
        %v1670 = vcvt.s32.f32 %v1158
        %v1671 = vcvt.s32.f32 %v1159
        %v1672 = vcvt.s32.f32 %v1160
        %v1673 = vcvt.s32.f32 %v1161
        %v1674 = vcvt.s32.f32 %v1162
        %v1675 = vcvt.s32.f32 %v1163
        %v1676 = vcvt.s32.f32 %v1164
        %v1677 = vcvt.s32.f32 %v1165
        %v1678 = vcvt.s32.f32 %v1166
        %v1679 = vcvt.s32.f32 %v1167
        %v1680 = vcvt.s32.f32 %v1168
        %v1681 = vcvt.s32.f32 %v1169
        %v1682 = vcvt.s32.f32 %v1170
        %v1683 = vcvt.s32.f32 %v1171
        %v1684 = vcvt.s32.f32 %v1172
        %v1685 = vcvt.s32.f32 %v1173
        %v1686 = vcvt.s32.f32 %v1174
        %v1687 = vcvt.s32.f32 %v1175
        %v1688 = vcvt.s32.f32 %v1176
        %v1689 = vcvt.s32.f32 %v1177
        %v1690 = vcvt.s32.f32 %v1178
        %v1691 = vcvt.s32.f32 %v1179
        %v1692 = vcvt.s32.f32 %v1180
        %v1693 = vcvt.s32.f32 %v1181
        %v1694 = vcvt.s32.f32 %v1182
        %v1695 = vcvt.s32.f32 %v1183
        %v1696 = vcvt.s32.f32 %v1184
        %v1697 = vcvt.s32.f32 %v1185
        %v1698 = vcvt.s32.f32 %v1186
        %v1699 = vcvt.s32.f32 %v1187
        %v1700 = vcvt.s32.f32 %v1188
        %v1701 = vcvt.s32.f32 %v1189
        %v1702 = vcvt.s32.f32 %v1190
        %v1703 = vcvt.s32.f32 %v1191
        %v1704 = vcvt.s32.f32 %v1192
        %v1705 = vcvt.s32.f32 %v1193
        %v1706 = vcvt.s32.f32 %v1194
        %v1707 = vcvt.s32.f32 %v1195
        %v1708 = vcvt.s32.f32 %v1196
        %v1709 = vcvt.s32.f32 %v1197
        %v1710 = vcvt.s32.f32 %v1198
        %v1711 = vcvt.s32.f32 %v1199
        %v1712 = vcvt.s32.f32 %v1200
        %v1713 = vcvt.s32.f32 %v1201
        %v1714 = vcvt.s32.f32 %v1202
        %v1715 = vcvt.s32.f32 %v1203
        %v1716 = vcvt.s32.f32 %v1204
        %v1717 = vcvt.s32.f32 %v1205
        %v1718 = vcvt.s32.f32 %v1206
        %v1719 = vcvt.s32.f32 %v1207
        %v1720 = vcvt.s32.f32 %v1208
        %v1721 = vcvt.s32.f32 %v1209
        %v1722 = vcvt.s32.f32 %v1210
        %v1723 = vcvt.s32.f32 %v1211
        %v1724 = vcvt.s32.f32 %v1212
        %v1725 = vcvt.s32.f32 %v1213
        %v1726 = vcvt.s32.f32 %v1214
        %v1727 = vcvt.s32.f32 %v1215
        %v1728 = vcvt.s32.f32 %v1216
        %v1729 = vcvt.s32.f32 %v1217
        %v1730 = vcvt.s32.f32 %v1218
        %v1731 = vcvt.s32.f32 %v1219
        %v1732 = vcvt.s32.f32 %v1220
        %v1733 = vcvt.s32.f32 %v1221
        %v1734 = vcvt.s32.f32 %v1222
        %v1735 = vcvt.s32.f32 %v1223
        %v1736 = vcvt.s32.f32 %v1224
        %v1737 = vcvt.s32.f32 %v1225
        %v1738 = vcvt.s32.f32 %v1226
        %v1739 = vcvt.s32.f32 %v1227
        %v1740 = vcvt.s32.f32 %v1228
        %v1741 = vcvt.s32.f32 %v1229
        %v1742 = vcvt.s32.f32 %v1230
        %v1743 = vcvt.s32.f32 %v1231
        %v1744 = vcvt.s32.f32 %v1232
        %v1745 = vcvt.s32.f32 %v1233
        %v1746 = vcvt.s32.f32 %v1234
        %v1747 = vcvt.s32.f32 %v1235
        %v1748 = vcvt.s32.f32 %v1236
        %v1749 = vcvt.s32.f32 %v1237
        %v1750 = vcvt.s32.f32 %v1238
        %v1751 = vcvt.s32.f32 %v1239
        %v1752 = vcvt.s32.f32 %v1240
        %v1753 = vcvt.s32.f32 %v1241
        %v1754 = vcvt.s32.f32 %v1242
        %v1755 = vcvt.s32.f32 %v1243
        %v1756 = vcvt.s32.f32 %v1244
        %v1757 = vcvt.s32.f32 %v1245
        %v1758 = vcvt.s32.f32 %v1246
        %v1759 = vcvt.s32.f32 %v1247
        %v1760 = vcvt.s32.f32 %v1248
        %v1761 = vcvt.s32.f32 %v1249
        %v1762 = vcvt.s32.f32 %v1250
        %v1763 = vcvt.s32.f32 %v1251
        %v1764 = vcvt.s32.f32 %v1252
        %v1765 = vcvt.s32.f32 %v1253
        %v1766 = vcvt.s32.f32 %v1254
        %v1767 = vcvt.s32.f32 %v1255
        %v1768 = vcvt.s32.f32 %v1256
        %v1769 = vcvt.s32.f32 %v1257
        %v1770 = vcvt.s32.f32 %v1258
        %v1771 = vcvt.s32.f32 %v1259
        %v1772 = vcvt.s32.f32 %v1260
        %v1773 = vcvt.s32.f32 %v1261
        %v1774 = vcvt.s32.f32 %v1262
        %v1775 = vcvt.s32.f32 %v1263
        %v1776 = vcvt.s32.f32 %v1264
        %v1777 = vcvt.s32.f32 %v1265
        %v1778 = vcvt.s32.f32 %v1266
        %v1779 = vcvt.s32.f32 %v1267
        %v1780 = vcvt.s32.f32 %v1268
        %v1781 = vcvt.s32.f32 %v1269
        %v1782 = vcvt.s32.f32 %v1270
        %v1783 = vcvt.s32.f32 %v1271
        %v1784 = vcvt.s32.f32 %v1272
        %v1785 = vcvt.s32.f32 %v1273
        %v1786 = vcvt.s32.f32 %v1274
        %v1787 = vcvt.s32.f32 %v1275
        %v1788 = vcvt.s32.f32 %v1276
        %v1789 = vcvt.s32.f32 %v1277
        %v1790 = vcvt.s32.f32 %v1278
        %v1791 = vcvt.s32.f32 %v1279
        %v1792 = vcvt.s32.f32 %v1280
        %v1793 = vcvt.s32.f32 %v1281
        %v1794 = vcvt.s32.f32 %v1282
        %v1795 = vcvt.s32.f32 %v1283
        %v1796 = vcvt.s32.f32 %v1284
        %v1797 = vcvt.s32.f32 %v1285
        %v1798 = vcvt.s32.f32 %v1286
        %v1799 = vld [vmem:[%s1] sm:$0xff]
        %v1801 = vcombine.high %v1799, %v1799
        %1803 = vmatprep.subr.mxu0 %v1288
        %1804 = vmatpush1.msra.mxu0 %v1287
        %1805 = vmatprep.subr.mxu0 %v1304
        %1806 = vmatpush1.msra.mxu0 %v1303
        %1807 = vmatprep.subr.mxu0 %v1320
        %1808 = vmatpush1.msra.mxu0 %v1319
        %1809 = vmatprep.subr.mxu0 %v1336
        %1810 = vmatpush1.msra.mxu0 %v1335
        %1811 = vmatprep.subr.mxu0 %v1352
        %1812 = vmatpush1.msra.mxu0 %v1351
        %1813 = vmatprep.subr.mxu0 %v1368
        %1814 = vmatpush1.msra.mxu0 %v1367
        %1815 = vmatprep.subr.mxu0 %v1384
        %1816 = vmatpush1.msra.mxu0 %v1383
        %1817 = vmatprep.subr.mxu0 %v1400
        %1818 = vmatpush1.msra.mxu0 %v1399
        %1819 = vmatprep.subr.mxu0 %v1416
        %1820 = vmatpush1.msra.mxu0 %v1415
        %1821 = vmatprep.subr.mxu0 %v1432
        %1822 = vmatpush1.msra.mxu0 %v1431
        %1823 = vmatprep.subr.mxu0 %v1448
        %1824 = vmatpush1.msra.mxu0 %v1447
        %1825 = vmatprep.subr.mxu0 %v1464
        %1826 = vmatpush1.msra.mxu0 %v1463
        %1827 = vmatprep.subr.mxu0 %v1480
        %1828 = vmatpush1.msra.mxu0 %v1479
        %1829 = vmatprep.subr.mxu0 %v1496
        %1830 = vmatpush1.msra.mxu0 %v1495
        %1831 = vmatprep.subr.mxu0 %v1512
        %1832 = vmatpush1.msra.mxu0 %v1511
        %1833 = vmatprep.subr.mxu0 %v1528
        %1834 = vmatpush1.msra.mxu0 %v1527
        %1835 = vmatprep.subr.mxu0 %v1544
        %1836 = vmatpush1.msra.mxu0 %v1543
        %1837 = vmatprep.subr.mxu0 %v1560
        %1838 = vmatpush1.msra.mxu0 %v1559
        %1839 = vmatprep.subr.mxu0 %v1576
        %1840 = vmatpush1.msra.mxu0 %v1575
        %1841 = vmatprep.subr.mxu0 %v1592
        %1842 = vmatpush1.msra.mxu0 %v1591
        %1843 = vmatprep.subr.mxu0 %v1608
        %1844 = vmatpush1.msra.mxu0 %v1607
        %1845 = vmatprep.subr.mxu0 %v1624
        %1846 = vmatpush1.msra.mxu0 %v1623
        %1847 = vmatprep.subr.mxu0 %v1640
        %1848 = vmatpush1.msra.mxu0 %v1639
        %1849 = vmatprep.subr.mxu0 %v1656
        %1850 = vmatpush1.msra.mxu0 %v1655
        %1851 = vmatprep.subr.mxu0 %v1672
        %1852 = vmatpush1.msra.mxu0 %v1671
        %1853 = vmatprep.subr.mxu0 %v1688
        %1854 = vmatpush1.msra.mxu0 %v1687
        %1855 = vmatprep.subr.mxu0 %v1704
        %1856 = vmatpush1.msra.mxu0 %v1703
        %1857 = vmatprep.subr.mxu0 %v1720
        %1858 = vmatpush1.msra.mxu0 %v1719
        %1859 = vmatprep.subr.mxu0 %v1736
        %1860 = vmatpush1.msra.mxu0 %v1735
        %1861 = vmatprep.subr.mxu0 %v1752
        %1862 = vmatpush1.msra.mxu0 %v1751
        %1863 = vmatprep.subr.mxu0 %v1768
        %1864 = vmatpush1.msra.mxu0 %v1767
        %1865 = vmatprep.subr.mxu0 %v1784
        %1866 = vmatpush1.msra.mxu0 %v1783
        %1867 = vmatprep.mubr.f32.mxu0 %v1801
        %1868 = vmatmul.mubr.f32.gmra.mrb[0].mxu0 %v1799
        %v1869 = vpop.f32.mrb[0].mxu0
        %v1870 = vadd.f32 0.0, %v1869
        %v1871 = vpop.f32.mrb[0].mxu0
        %v1872 = vadd.f32 0.0, %v1871
        %1873 = vdwg.mxu0
        %1874 = vmatprep.subr.mxu0 %v1290
        %1875 = vmatpush1.msra.mxu0 %v1289
        %1876 = vmatprep.subr.mxu0 %v1306
        %1877 = vmatpush1.msra.mxu0 %v1305
        %1878 = vmatprep.subr.mxu0 %v1322
        %1879 = vmatpush1.msra.mxu0 %v1321
        %1880 = vmatprep.subr.mxu0 %v1338
        %1881 = vmatpush1.msra.mxu0 %v1337
        %1882 = vmatprep.subr.mxu0 %v1354
        %1883 = vmatpush1.msra.mxu0 %v1353
        %1884 = vmatprep.subr.mxu0 %v1370
        %1885 = vmatpush1.msra.mxu0 %v1369
        %1886 = vmatprep.subr.mxu0 %v1386
        %1887 = vmatpush1.msra.mxu0 %v1385
        %1888 = vmatprep.subr.mxu0 %v1402
        %1889 = vmatpush1.msra.mxu0 %v1401
        %1890 = vmatprep.subr.mxu0 %v1418
        %1891 = vmatpush1.msra.mxu0 %v1417
        %1892 = vmatprep.subr.mxu0 %v1434
        %1893 = vmatpush1.msra.mxu0 %v1433
        %1894 = vmatprep.subr.mxu0 %v1450
        %1895 = vmatpush1.msra.mxu0 %v1449
        %1896 = vmatprep.subr.mxu0 %v1466
        %1897 = vmatpush1.msra.mxu0 %v1465
        %1898 = vmatprep.subr.mxu0 %v1482
        %1899 = vmatpush1.msra.mxu0 %v1481
        %1900 = vmatprep.subr.mxu0 %v1498
        %1901 = vmatpush1.msra.mxu0 %v1497
        %1902 = vmatprep.subr.mxu0 %v1514
        %1903 = vmatpush1.msra.mxu0 %v1513
        %1904 = vmatprep.subr.mxu0 %v1530
        %1905 = vmatpush1.msra.mxu0 %v1529
        %1906 = vmatprep.subr.mxu0 %v1546
        %1907 = vmatpush1.msra.mxu0 %v1545
        %1908 = vmatprep.subr.mxu0 %v1562
        %1909 = vmatpush1.msra.mxu0 %v1561
        %1910 = vmatprep.subr.mxu0 %v1578
        %1911 = vmatpush1.msra.mxu0 %v1577
        %1912 = vmatprep.subr.mxu0 %v1594
        %1913 = vmatpush1.msra.mxu0 %v1593
        %1914 = vmatprep.subr.mxu0 %v1610
        %1915 = vmatpush1.msra.mxu0 %v1609
        %1916 = vmatprep.subr.mxu0 %v1626
        %1917 = vmatpush1.msra.mxu0 %v1625
        %1918 = vmatprep.subr.mxu0 %v1642
        %1919 = vmatpush1.msra.mxu0 %v1641
        %1920 = vmatprep.subr.mxu0 %v1658
        %1921 = vmatpush1.msra.mxu0 %v1657
        %1922 = vmatprep.subr.mxu0 %v1674
        %1923 = vmatpush1.msra.mxu0 %v1673
        %1924 = vmatprep.subr.mxu0 %v1690
        %1925 = vmatpush1.msra.mxu0 %v1689
        %1926 = vmatprep.subr.mxu0 %v1706
        %1927 = vmatpush1.msra.mxu0 %v1705
        %1928 = vmatprep.subr.mxu0 %v1722
        %1929 = vmatpush1.msra.mxu0 %v1721
        %1930 = vmatprep.subr.mxu0 %v1738
        %1931 = vmatpush1.msra.mxu0 %v1737
        %1932 = vmatprep.subr.mxu0 %v1754
        %1933 = vmatpush1.msra.mxu0 %v1753
        %1934 = vmatprep.subr.mxu0 %v1770
        %1935 = vmatpush1.msra.mxu0 %v1769
        %1936 = vmatprep.subr.mxu0 %v1786
        %1937 = vmatpush1.msra.mxu0 %v1785
        %1938 = vmatprep.mubr.f32.mxu0 %v1801
        %1939 = vmatmul.mubr.f32.gmra.mrb[0].mxu0 %v1799
        %v1940 = vpop.f32.mrb[0].mxu0
        %v1941 = vadd.f32 0.0, %v1940
        %v1942 = vpop.f32.mrb[0].mxu0
        %v1943 = vadd.f32 0.0, %v1942
        %1944 = vdwg.mxu0
        %1945 = vmatprep.subr.mxu0 %v1292
        %1946 = vmatpush1.msra.mxu0 %v1291
        %1947 = vmatprep.subr.mxu0 %v1308
        %1948 = vmatpush1.msra.mxu0 %v1307
        %1949 = vmatprep.subr.mxu0 %v1324
        %1950 = vmatpush1.msra.mxu0 %v1323
        %1951 = vmatprep.subr.mxu0 %v1340
        %1952 = vmatpush1.msra.mxu0 %v1339
        %1953 = vmatprep.subr.mxu0 %v1356
        %1954 = vmatpush1.msra.mxu0 %v1355
        %1955 = vmatprep.subr.mxu0 %v1372
        %1956 = vmatpush1.msra.mxu0 %v1371
        %1957 = vmatprep.subr.mxu0 %v1388
        %1958 = vmatpush1.msra.mxu0 %v1387
        %1959 = vmatprep.subr.mxu0 %v1404
        %1960 = vmatpush1.msra.mxu0 %v1403
        %1961 = vmatprep.subr.mxu0 %v1420
        %1962 = vmatpush1.msra.mxu0 %v1419
        %1963 = vmatprep.subr.mxu0 %v1436
        %1964 = vmatpush1.msra.mxu0 %v1435
        %1965 = vmatprep.subr.mxu0 %v1452
        %1966 = vmatpush1.msra.mxu0 %v1451
        %1967 = vmatprep.subr.mxu0 %v1468
        %1968 = vmatpush1.msra.mxu0 %v1467
        %1969 = vmatprep.subr.mxu0 %v1484
        %1970 = vmatpush1.msra.mxu0 %v1483
        %1971 = vmatprep.subr.mxu0 %v1500
        %1972 = vmatpush1.msra.mxu0 %v1499
        %1973 = vmatprep.subr.mxu0 %v1516
        %1974 = vmatpush1.msra.mxu0 %v1515
        %1975 = vmatprep.subr.mxu0 %v1532
        %1976 = vmatpush1.msra.mxu0 %v1531
        %1977 = vmatprep.subr.mxu0 %v1548
        %1978 = vmatpush1.msra.mxu0 %v1547
        %1979 = vmatprep.subr.mxu0 %v1564
        %1980 = vmatpush1.msra.mxu0 %v1563
        %1981 = vmatprep.subr.mxu0 %v1580
        %1982 = vmatpush1.msra.mxu0 %v1579
        %1983 = vmatprep.subr.mxu0 %v1596
        %1984 = vmatpush1.msra.mxu0 %v1595
        %1985 = vmatprep.subr.mxu0 %v1612
        %1986 = vmatpush1.msra.mxu0 %v1611
        %1987 = vmatprep.subr.mxu0 %v1628
        %1988 = vmatpush1.msra.mxu0 %v1627
        %1989 = vmatprep.subr.mxu0 %v1644
        %1990 = vmatpush1.msra.mxu0 %v1643
        %1991 = vmatprep.subr.mxu0 %v1660
        %1992 = vmatpush1.msra.mxu0 %v1659
        %1993 = vmatprep.subr.mxu0 %v1676
        %1994 = vmatpush1.msra.mxu0 %v1675
        %1995 = vmatprep.subr.mxu0 %v1692
        %1996 = vmatpush1.msra.mxu0 %v1691
        %1997 = vmatprep.subr.mxu0 %v1708
        %1998 = vmatpush1.msra.mxu0 %v1707
        %1999 = vmatprep.subr.mxu0 %v1724
        %2000 = vmatpush1.msra.mxu0 %v1723
        %2001 = vmatprep.subr.mxu0 %v1740
        %2002 = vmatpush1.msra.mxu0 %v1739
        %2003 = vmatprep.subr.mxu0 %v1756
        %2004 = vmatpush1.msra.mxu0 %v1755
        %2005 = vmatprep.subr.mxu0 %v1772
        %2006 = vmatpush1.msra.mxu0 %v1771
        %2007 = vmatprep.subr.mxu0 %v1788
        %2008 = vmatpush1.msra.mxu0 %v1787
        %2009 = vmatprep.mubr.f32.mxu0 %v1801
        %2010 = vmatmul.mubr.f32.gmra.mrb[0].mxu0 %v1799
        %v2011 = vpop.f32.mrb[0].mxu0
        %v2012 = vadd.f32 0.0, %v2011
        %v2013 = vpop.f32.mrb[0].mxu0
        %v2014 = vadd.f32 0.0, %v2013
        %2015 = vdwg.mxu0
        %2016 = vmatprep.subr.mxu0 %v1294
        %2017 = vmatpush1.msra.mxu0 %v1293
        %2018 = vmatprep.subr.mxu0 %v1310
        %2019 = vmatpush1.msra.mxu0 %v1309
        %2020 = vmatprep.subr.mxu0 %v1326
        %2021 = vmatpush1.msra.mxu0 %v1325
        %2022 = vmatprep.subr.mxu0 %v1342
        %2023 = vmatpush1.msra.mxu0 %v1341
        %2024 = vmatprep.subr.mxu0 %v1358
        %2025 = vmatpush1.msra.mxu0 %v1357
        %2026 = vmatprep.subr.mxu0 %v1374
        %2027 = vmatpush1.msra.mxu0 %v1373
        %2028 = vmatprep.subr.mxu0 %v1390
        %2029 = vmatpush1.msra.mxu0 %v1389
        %2030 = vmatprep.subr.mxu0 %v1406
        %2031 = vmatpush1.msra.mxu0 %v1405
        %2032 = vmatprep.subr.mxu0 %v1422
        %2033 = vmatpush1.msra.mxu0 %v1421
        %2034 = vmatprep.subr.mxu0 %v1438
        %2035 = vmatpush1.msra.mxu0 %v1437
        %2036 = vmatprep.subr.mxu0 %v1454
        %2037 = vmatpush1.msra.mxu0 %v1453
        %2038 = vmatprep.subr.mxu0 %v1470
        %2039 = vmatpush1.msra.mxu0 %v1469
        %2040 = vmatprep.subr.mxu0 %v1486
        %2041 = vmatpush1.msra.mxu0 %v1485
        %2042 = vmatprep.subr.mxu0 %v1502
        %2043 = vmatpush1.msra.mxu0 %v1501
        %2044 = vmatprep.subr.mxu0 %v1518
        %2045 = vmatpush1.msra.mxu0 %v1517
        %2046 = vmatprep.subr.mxu0 %v1534
        %2047 = vmatpush1.msra.mxu0 %v1533
        %2048 = vmatprep.subr.mxu0 %v1550
        %2049 = vmatpush1.msra.mxu0 %v1549
        %2050 = vmatprep.subr.mxu0 %v1566
        %2051 = vmatpush1.msra.mxu0 %v1565
        %2052 = vmatprep.subr.mxu0 %v1582
        %2053 = vmatpush1.msra.mxu0 %v1581
        %2054 = vmatprep.subr.mxu0 %v1598
        %2055 = vmatpush1.msra.mxu0 %v1597
        %2056 = vmatprep.subr.mxu0 %v1614
        %2057 = vmatpush1.msra.mxu0 %v1613
        %2058 = vmatprep.subr.mxu0 %v1630
        %2059 = vmatpush1.msra.mxu0 %v1629
        %2060 = vmatprep.subr.mxu0 %v1646
        %2061 = vmatpush1.msra.mxu0 %v1645
        %2062 = vmatprep.subr.mxu0 %v1662
        %2063 = vmatpush1.msra.mxu0 %v1661
        %2064 = vmatprep.subr.mxu0 %v1678
        %2065 = vmatpush1.msra.mxu0 %v1677
        %2066 = vmatprep.subr.mxu0 %v1694
        %2067 = vmatpush1.msra.mxu0 %v1693
        %2068 = vmatprep.subr.mxu0 %v1710
        %2069 = vmatpush1.msra.mxu0 %v1709
        %2070 = vmatprep.subr.mxu0 %v1726
        %2071 = vmatpush1.msra.mxu0 %v1725
        %2072 = vmatprep.subr.mxu0 %v1742
        %2073 = vmatpush1.msra.mxu0 %v1741
        %2074 = vmatprep.subr.mxu0 %v1758
        %2075 = vmatpush1.msra.mxu0 %v1757
        %2076 = vmatprep.subr.mxu0 %v1774
        %2077 = vmatpush1.msra.mxu0 %v1773
        %2078 = vmatprep.subr.mxu0 %v1790
        %2079 = vmatpush1.msra.mxu0 %v1789
        %2080 = vmatprep.mubr.f32.mxu0 %v1801
        %2081 = vmatmul.mubr.f32.gmra.mrb[0].mxu0 %v1799
        %v2082 = vpop.f32.mrb[0].mxu0
        %v2083 = vadd.f32 0.0, %v2082
        %v2084 = vpop.f32.mrb[0].mxu0
        %v2085 = vadd.f32 0.0, %v2084
        %2086 = vdwg.mxu0
        %2087 = vmatprep.subr.mxu0 %v1296
        %2088 = vmatpush1.msra.mxu0 %v1295
        %2089 = vmatprep.subr.mxu0 %v1312
        %2090 = vmatpush1.msra.mxu0 %v1311
        %2091 = vmatprep.subr.mxu0 %v1328
        %2092 = vmatpush1.msra.mxu0 %v1327
        %2093 = vmatprep.subr.mxu0 %v1344
        %2094 = vmatpush1.msra.mxu0 %v1343
        %2095 = vmatprep.subr.mxu0 %v1360
        %2096 = vmatpush1.msra.mxu0 %v1359
        %2097 = vmatprep.subr.mxu0 %v1376
        %2098 = vmatpush1.msra.mxu0 %v1375
        %2099 = vmatprep.subr.mxu0 %v1392
        %2100 = vmatpush1.msra.mxu0 %v1391
        %2101 = vmatprep.subr.mxu0 %v1408
        %2102 = vmatpush1.msra.mxu0 %v1407
        %2103 = vmatprep.subr.mxu0 %v1424
        %2104 = vmatpush1.msra.mxu0 %v1423
        %2105 = vmatprep.subr.mxu0 %v1440
        %2106 = vmatpush1.msra.mxu0 %v1439
        %2107 = vmatprep.subr.mxu0 %v1456
        %2108 = vmatpush1.msra.mxu0 %v1455
        %2109 = vmatprep.subr.mxu0 %v1472
        %2110 = vmatpush1.msra.mxu0 %v1471
        %2111 = vmatprep.subr.mxu0 %v1488
        %2112 = vmatpush1.msra.mxu0 %v1487
        %2113 = vmatprep.subr.mxu0 %v1504
        %2114 = vmatpush1.msra.mxu0 %v1503
        %2115 = vmatprep.subr.mxu0 %v1520
        %2116 = vmatpush1.msra.mxu0 %v1519
        %2117 = vmatprep.subr.mxu0 %v1536
        %2118 = vmatpush1.msra.mxu0 %v1535
        %2119 = vmatprep.subr.mxu0 %v1552
        %2120 = vmatpush1.msra.mxu0 %v1551
        %2121 = vmatprep.subr.mxu0 %v1568
        %2122 = vmatpush1.msra.mxu0 %v1567
        %2123 = vmatprep.subr.mxu0 %v1584
        %2124 = vmatpush1.msra.mxu0 %v1583
        %2125 = vmatprep.subr.mxu0 %v1600
        %2126 = vmatpush1.msra.mxu0 %v1599
        %2127 = vmatprep.subr.mxu0 %v1616
        %2128 = vmatpush1.msra.mxu0 %v1615
        %2129 = vmatprep.subr.mxu0 %v1632
        %2130 = vmatpush1.msra.mxu0 %v1631
        %2131 = vmatprep.subr.mxu0 %v1648
        %2132 = vmatpush1.msra.mxu0 %v1647
        %2133 = vmatprep.subr.mxu0 %v1664
        %2134 = vmatpush1.msra.mxu0 %v1663
        %2135 = vmatprep.subr.mxu0 %v1680
        %2136 = vmatpush1.msra.mxu0 %v1679
        %2137 = vmatprep.subr.mxu0 %v1696
        %2138 = vmatpush1.msra.mxu0 %v1695
        %2139 = vmatprep.subr.mxu0 %v1712
        %2140 = vmatpush1.msra.mxu0 %v1711
        %2141 = vmatprep.subr.mxu0 %v1728
        %2142 = vmatpush1.msra.mxu0 %v1727
        %2143 = vmatprep.subr.mxu0 %v1744
        %2144 = vmatpush1.msra.mxu0 %v1743
        %2145 = vmatprep.subr.mxu0 %v1760
        %2146 = vmatpush1.msra.mxu0 %v1759
        %2147 = vmatprep.subr.mxu0 %v1776
        %2148 = vmatpush1.msra.mxu0 %v1775
        %2149 = vmatprep.subr.mxu0 %v1792
        %2150 = vmatpush1.msra.mxu0 %v1791
        %2151 = vmatprep.mubr.f32.mxu0 %v1801
        %2152 = vmatmul.mubr.f32.gmra.mrb[0].mxu0 %v1799
        %v2153 = vpop.f32.mrb[0].mxu0
        %v2154 = vadd.f32 0.0, %v2153
        %v2155 = vpop.f32.mrb[0].mxu0
        %v2156 = vadd.f32 0.0, %v2155
        %2157 = vdwg.mxu0
        %2158 = vmatprep.subr.mxu0 %v1298
        %2159 = vmatpush1.msra.mxu0 %v1297
        %2160 = vmatprep.subr.mxu0 %v1314
        %2161 = vmatpush1.msra.mxu0 %v1313
        %2162 = vmatprep.subr.mxu0 %v1330
        %2163 = vmatpush1.msra.mxu0 %v1329
        %2164 = vmatprep.subr.mxu0 %v1346
        %2165 = vmatpush1.msra.mxu0 %v1345
        %2166 = vmatprep.subr.mxu0 %v1362
        %2167 = vmatpush1.msra.mxu0 %v1361
        %2168 = vmatprep.subr.mxu0 %v1378
        %2169 = vmatpush1.msra.mxu0 %v1377
        %2170 = vmatprep.subr.mxu0 %v1394
        %2171 = vmatpush1.msra.mxu0 %v1393
        %2172 = vmatprep.subr.mxu0 %v1410
        %2173 = vmatpush1.msra.mxu0 %v1409
        %2174 = vmatprep.subr.mxu0 %v1426
        %2175 = vmatpush1.msra.mxu0 %v1425
        %2176 = vmatprep.subr.mxu0 %v1442
        %2177 = vmatpush1.msra.mxu0 %v1441
        %2178 = vmatprep.subr.mxu0 %v1458
        %2179 = vmatpush1.msra.mxu0 %v1457
        %2180 = vmatprep.subr.mxu0 %v1474
        %2181 = vmatpush1.msra.mxu0 %v1473
        %2182 = vmatprep.subr.mxu0 %v1490
        %2183 = vmatpush1.msra.mxu0 %v1489
        %2184 = vmatprep.subr.mxu0 %v1506
        %2185 = vmatpush1.msra.mxu0 %v1505
        %2186 = vmatprep.subr.mxu0 %v1522
        %2187 = vmatpush1.msra.mxu0 %v1521
        %2188 = vmatprep.subr.mxu0 %v1538
        %2189 = vmatpush1.msra.mxu0 %v1537
        %2190 = vmatprep.subr.mxu0 %v1554
        %2191 = vmatpush1.msra.mxu0 %v1553
        %2192 = vmatprep.subr.mxu0 %v1570
        %2193 = vmatpush1.msra.mxu0 %v1569
        %2194 = vmatprep.subr.mxu0 %v1586
        %2195 = vmatpush1.msra.mxu0 %v1585
        %2196 = vmatprep.subr.mxu0 %v1602
        %2197 = vmatpush1.msra.mxu0 %v1601
        %2198 = vmatprep.subr.mxu0 %v1618
        %2199 = vmatpush1.msra.mxu0 %v1617
        %2200 = vmatprep.subr.mxu0 %v1634
        %2201 = vmatpush1.msra.mxu0 %v1633
        %2202 = vmatprep.subr.mxu0 %v1650
        %2203 = vmatpush1.msra.mxu0 %v1649
        %2204 = vmatprep.subr.mxu0 %v1666
        %2205 = vmatpush1.msra.mxu0 %v1665
        %2206 = vmatprep.subr.mxu0 %v1682
        %2207 = vmatpush1.msra.mxu0 %v1681
        %2208 = vmatprep.subr.mxu0 %v1698
        %2209 = vmatpush1.msra.mxu0 %v1697
        %2210 = vmatprep.subr.mxu0 %v1714
        %2211 = vmatpush1.msra.mxu0 %v1713
        %2212 = vmatprep.subr.mxu0 %v1730
        %2213 = vmatpush1.msra.mxu0 %v1729
        %2214 = vmatprep.subr.mxu0 %v1746
        %2215 = vmatpush1.msra.mxu0 %v1745
        %2216 = vmatprep.subr.mxu0 %v1762
        %2217 = vmatpush1.msra.mxu0 %v1761
        %2218 = vmatprep.subr.mxu0 %v1778
        %2219 = vmatpush1.msra.mxu0 %v1777
        %2220 = vmatprep.subr.mxu0 %v1794
        %2221 = vmatpush1.msra.mxu0 %v1793
        %2222 = vmatprep.mubr.f32.mxu0 %v1801
        %2223 = vmatmul.mubr.f32.gmra.mrb[0].mxu0 %v1799
        %v2224 = vpop.f32.mrb[0].mxu0
        %v2225 = vadd.f32 0.0, %v2224
        %v2226 = vpop.f32.mrb[0].mxu0
        %v2227 = vadd.f32 0.0, %v2226
        %2228 = vdwg.mxu0
        %2229 = vmatprep.subr.mxu0 %v1300
        %2230 = vmatpush1.msra.mxu0 %v1299
        %2231 = vmatprep.subr.mxu0 %v1316
        %2232 = vmatpush1.msra.mxu0 %v1315
        %2233 = vmatprep.subr.mxu0 %v1332
        %2234 = vmatpush1.msra.mxu0 %v1331
        %2235 = vmatprep.subr.mxu0 %v1348
        %2236 = vmatpush1.msra.mxu0 %v1347
        %2237 = vmatprep.subr.mxu0 %v1364
        %2238 = vmatpush1.msra.mxu0 %v1363
        %2239 = vmatprep.subr.mxu0 %v1380
        %2240 = vmatpush1.msra.mxu0 %v1379
        %2241 = vmatprep.subr.mxu0 %v1396
        %2242 = vmatpush1.msra.mxu0 %v1395
        %2243 = vmatprep.subr.mxu0 %v1412
        %2244 = vmatpush1.msra.mxu0 %v1411
        %2245 = vmatprep.subr.mxu0 %v1428
        %2246 = vmatpush1.msra.mxu0 %v1427
        %2247 = vmatprep.subr.mxu0 %v1444
        %2248 = vmatpush1.msra.mxu0 %v1443
        %2249 = vmatprep.subr.mxu0 %v1460
        %2250 = vmatpush1.msra.mxu0 %v1459
        %2251 = vmatprep.subr.mxu0 %v1476
        %2252 = vmatpush1.msra.mxu0 %v1475
        %2253 = vmatprep.subr.mxu0 %v1492
        %2254 = vmatpush1.msra.mxu0 %v1491
        %2255 = vmatprep.subr.mxu0 %v1508
        %2256 = vmatpush1.msra.mxu0 %v1507
        %2257 = vmatprep.subr.mxu0 %v1524
        %2258 = vmatpush1.msra.mxu0 %v1523
        %2259 = vmatprep.subr.mxu0 %v1540
        %2260 = vmatpush1.msra.mxu0 %v1539
        %2261 = vmatprep.subr.mxu0 %v1556
        %2262 = vmatpush1.msra.mxu0 %v1555
        %2263 = vmatprep.subr.mxu0 %v1572
        %2264 = vmatpush1.msra.mxu0 %v1571
        %2265 = vmatprep.subr.mxu0 %v1588
        %2266 = vmatpush1.msra.mxu0 %v1587
        %2267 = vmatprep.subr.mxu0 %v1604
        %2268 = vmatpush1.msra.mxu0 %v1603
        %2269 = vmatprep.subr.mxu0 %v1620
        %2270 = vmatpush1.msra.mxu0 %v1619
        %2271 = vmatprep.subr.mxu0 %v1636
        %2272 = vmatpush1.msra.mxu0 %v1635
        %2273 = vmatprep.subr.mxu0 %v1652
        %2274 = vmatpush1.msra.mxu0 %v1651
        %2275 = vmatprep.subr.mxu0 %v1668
        %2276 = vmatpush1.msra.mxu0 %v1667
        %2277 = vmatprep.subr.mxu0 %v1684
        %2278 = vmatpush1.msra.mxu0 %v1683
        %2279 = vmatprep.subr.mxu0 %v1700
        %2280 = vmatpush1.msra.mxu0 %v1699
        %2281 = vmatprep.subr.mxu0 %v1716
        %2282 = vmatpush1.msra.mxu0 %v1715
        %2283 = vmatprep.subr.mxu0 %v1732
        %2284 = vmatpush1.msra.mxu0 %v1731
        %2285 = vmatprep.subr.mxu0 %v1748
        %2286 = vmatpush1.msra.mxu0 %v1747
        %2287 = vmatprep.subr.mxu0 %v1764
        %2288 = vmatpush1.msra.mxu0 %v1763
        %2289 = vmatprep.subr.mxu0 %v1780
        %2290 = vmatpush1.msra.mxu0 %v1779
        %2291 = vmatprep.subr.mxu0 %v1796
        %2292 = vmatpush1.msra.mxu0 %v1795
        %2293 = vmatprep.mubr.f32.mxu0 %v1801
        %2294 = vmatmul.mubr.f32.gmra.mrb[0].mxu0 %v1799
        %v2295 = vpop.f32.mrb[0].mxu0
        %v2296 = vadd.f32 0.0, %v2295
        %v2297 = vpop.f32.mrb[0].mxu0
        %v2298 = vadd.f32 0.0, %v2297
        %2299 = vdwg.mxu0
        %2300 = vmatprep.subr.mxu0 %v1302
        %2301 = vmatpush1.msra.mxu0 %v1301
        %2302 = vmatprep.subr.mxu0 %v1318
        %2303 = vmatpush1.msra.mxu0 %v1317
        %2304 = vmatprep.subr.mxu0 %v1334
        %2305 = vmatpush1.msra.mxu0 %v1333
        %2306 = vmatprep.subr.mxu0 %v1350
        %2307 = vmatpush1.msra.mxu0 %v1349
        %2308 = vmatprep.subr.mxu0 %v1366
        %2309 = vmatpush1.msra.mxu0 %v1365
        %2310 = vmatprep.subr.mxu0 %v1382
        %2311 = vmatpush1.msra.mxu0 %v1381
        %2312 = vmatprep.subr.mxu0 %v1398
        %2313 = vmatpush1.msra.mxu0 %v1397
        %2314 = vmatprep.subr.mxu0 %v1414
        %2315 = vmatpush1.msra.mxu0 %v1413
        %2316 = vmatprep.subr.mxu0 %v1430
        %2317 = vmatpush1.msra.mxu0 %v1429
        %2318 = vmatprep.subr.mxu0 %v1446
        %2319 = vmatpush1.msra.mxu0 %v1445
        %2320 = vmatprep.subr.mxu0 %v1462
        %2321 = vmatpush1.msra.mxu0 %v1461
        %2322 = vmatprep.subr.mxu0 %v1478
        %2323 = vmatpush1.msra.mxu0 %v1477
        %2324 = vmatprep.subr.mxu0 %v1494
        %2325 = vmatpush1.msra.mxu0 %v1493
        %2326 = vmatprep.subr.mxu0 %v1510
        %2327 = vmatpush1.msra.mxu0 %v1509
        %2328 = vmatprep.subr.mxu0 %v1526
        %2329 = vmatpush1.msra.mxu0 %v1525
        %2330 = vmatprep.subr.mxu0 %v1542
        %2331 = vmatpush1.msra.mxu0 %v1541
        %2332 = vmatprep.subr.mxu0 %v1558
        %2333 = vmatpush1.msra.mxu0 %v1557
        %2334 = vmatprep.subr.mxu0 %v1574
        %2335 = vmatpush1.msra.mxu0 %v1573
        %2336 = vmatprep.subr.mxu0 %v1590
        %2337 = vmatpush1.msra.mxu0 %v1589
        %2338 = vmatprep.subr.mxu0 %v1606
        %2339 = vmatpush1.msra.mxu0 %v1605
        %2340 = vmatprep.subr.mxu0 %v1622
        %2341 = vmatpush1.msra.mxu0 %v1621
        %2342 = vmatprep.subr.mxu0 %v1638
        %2343 = vmatpush1.msra.mxu0 %v1637
        %2344 = vmatprep.subr.mxu0 %v1654
        %2345 = vmatpush1.msra.mxu0 %v1653
        %2346 = vmatprep.subr.mxu0 %v1670
        %2347 = vmatpush1.msra.mxu0 %v1669
        %2348 = vmatprep.subr.mxu0 %v1686
        %2349 = vmatpush1.msra.mxu0 %v1685
        %2350 = vmatprep.subr.mxu0 %v1702
        %2351 = vmatpush1.msra.mxu0 %v1701
        %2352 = vmatprep.subr.mxu0 %v1718
        %2353 = vmatpush1.msra.mxu0 %v1717
        %2354 = vmatprep.subr.mxu0 %v1734
        %2355 = vmatpush1.msra.mxu0 %v1733
        %2356 = vmatprep.subr.mxu0 %v1750
        %2357 = vmatpush1.msra.mxu0 %v1749
        %2358 = vmatprep.subr.mxu0 %v1766
        %2359 = vmatpush1.msra.mxu0 %v1765
        %2360 = vmatprep.subr.mxu0 %v1782
        %2361 = vmatpush1.msra.mxu0 %v1781
        %2362 = vmatprep.subr.mxu0 %v1798
        %2363 = vmatpush1.msra.mxu0 %v1797
        %2364 = vmatprep.mubr.f32.mxu0 %v1801
        %2365 = vmatmul.mubr.f32.gmra.mrb[0].mxu0 %v1799
        %v2366 = vpop.f32.mrb[0].mxu0
        %v2367 = vadd.f32 0.0, %v2366
        %v2368 = vpop.f32.mrb[0].mxu0
        %v2369 = vadd.f32 0.0, %v2368
        %2370 = vdwg.mxu0
        %v2387 = vcombine.low %v1870, %v1872
        %v2388 = vcombine.low %v1941, %v1943
        %v2389 = vcombine.low %v2012, %v2014
        %v2390 = vcombine.low %v2083, %v2085
        %v2391 = vcombine.low %v2154, %v2156
        %v2392 = vcombine.low %v2225, %v2227
        %v2393 = vcombine.low %v2296, %v2298
        %v2394 = vcombine.low %v2367, %v2369
        %2403 = vst [vmem:[%s162] sm:$0xff] %v2387
        %2404 = vst [vmem:[%s162 + $0x8] sm:$0xff] %v2388
        %2405 = vst [vmem:[%s162 + $0x10] sm:$0xff] %v2389
        %2406 = vst [vmem:[%s162 + $0x18] sm:$0xff] %v2390
        %2407 = vst [vmem:[%s162 + $0x20] sm:$0xff] %v2391
        %2408 = vst [vmem:[%s162 + $0x28] sm:$0xff] %v2392
        %2409 = vst [vmem:[%s162 + $0x30] sm:$0xff] %v2393
        %2410 = vst [vmem:[%s162 + $0x38] sm:$0xff] %v2394
        %s2411 = smul.u32 16, %s16
        %p2412 = scmp.lt.s32.totalorder %s2411, 127
        %s2413 = scalar_select %p2412, %s2411, 127
        %s2414 = smul.addr %s2413, 4
        %s2415 = scalar_lea.vmem %s2, %s2414
        // Predicated region
        $region33: #{_lambda_.1} parent=27 // pred_check
          %p2416 = pneg %p81
        $region34: #{_lambda_.1} parent=27 // pred_check_branch
          %2418 = sbr.rel (%p2416) target = $region36
        $region35: #{_lambda_.1} parent=27 // pred_region
          %s2419 = smul.u32 16, %s16
        $region36: #{_lambda_.1} parent=27 // pred_fallthru
          _
      $region28: #{_lambda_.1} parent=5 // pred_fallthru
        _
      %p2420 = scmp.le.s32.totalorder 2, %s11
      // Predicated region
      $region37: #{_lambda_.1} parent=5 // pred_check
        %p2421 = pneg %p2420
      $region38: #{_lambda_.1} parent=5 // pred_check_branch
        %2423 = sbr.rel (%p2421) target = $region40
      $region39: #{_lambda_.1} parent=5 // pred_region
        %s2424 = ssub.s32 %s11, 2
        // Predicated region
        $region41: #{_lambda_.1} parent=39 // pred_check
          %p2425 = pneg %p87
        $region42: #{_lambda_.1} parent=39 // pred_check_branch
          %2427 = sbr.rel (%p2425) target = $region44
        $region43: #{_lambda_.1} parent=39 // pred_region
          %s2428 = smul.u32 16, %s17
          %p2429 = scmp.lt.s32.totalorder %s2428, 127
          %s2430 = scalar_select %p2429, %s2428, 127
          %s2431 = smul.addr %s2430, 4
          %s2432 = scalar_lea.vmem %s2, %s2431
        $region44: #{_lambda_.1} parent=39 // pred_fallthru
          _
      $region40: #{_lambda_.1} parent=5 // pred_fallthru
        _
    $region6: #{_lambda_.1} parent=1 // loop_footer
      %s15 = sadd.s32 1, %s11
    $region7: #{_lambda_.1} parent=1 // loop_footer_branch
      %10 = sbr.rel target = $region3
    $region8: #{_lambda_.1} parent=1 // loop_exit
      _
    %2433 = vsyncpa [#allocation3], 1
    %s2434 = scalar_lea.sflag [#allocation3], 1
    %2435 = vsyncpa %s2434, 1

</llo_original>
